<compile_context>
chip_gen: v7x
topology: tpu7x:2x2x1
jax: 0.10.0
libtpu: 0.0.40
codegen_flags: <defaults>
</compile_context>

<pallas_src>
import functools

import jax
import jax.numpy as jnp
import numpy as np
from jax.experimental import pallas as pl
from jax.experimental.pallas import tpu as pltpu


def _snn_kernel(x_ref, lap_ref, w_ref, o_ref, z_ref, acc_ref, *, tile_n):
    """Grid point (p, i): polynomial degree p, Laplacian row-tile i.

    x_ref   : [N, Cin]            input features, VMEM-resident (compute dtype)
    lap_ref : [TILE_N, N]         row slab i of the dense Laplacian (compute dtype)
    w_ref   : [Cin, Cout_pad]     W_p (degree-p conv weight), lane-padded
    o_ref   : [TILE_N, Cout_pad]  output row tile (f32)
    z_ref   : [2, N, Cin]         ping-pong feature buffer (z_{p-1} / z_p)
    acc_ref : [N, Cout_pad]       f32 running aggregation over degrees
    """
    p = pl.program_id(0)
    i = pl.program_id(1)
    cdt = z_ref.dtype
    row0 = pl.multiple_of(i * tile_n, tile_n)
    rows = pl.ds(row0, tile_n)

    def project(z_tile):
        # relu(z_p[tile] @ W_p), f32 accumulation on the MXU.
        return jnp.maximum(
            jnp.dot(z_tile, w_ref[...], preferred_element_type=jnp.float32), 0.0)

    def step(z_prev_full, dst_slot):
        # z_p[tile i] = L[tile i, :] @ z_{p-1};  acc[tile i] += relu(z_p[tile i] @ W_p).
        z_new = jnp.dot(lap_ref[...], z_prev_full,
                        preferred_element_type=jnp.float32).astype(cdt)
        z_ref[dst_slot, rows, :] = z_new          # static ping-pong slot index
        acc_ref[rows, :] += project(z_new)

    @pl.when(p == 0)
    def _():
        # L^0 = I: degree-0 term is just relu(x @ W_0).  No identity matrix is built and
        # nothing is written to z (degree 1 propagates straight from the resident x).
        acc_ref[rows, :] = project(x_ref[rows, :])

    @pl.when(p == 1)
    def _():
        step(x_ref[...], 1)                       # z_1 from x, stored in slot 1

    @pl.when(jnp.logical_and(p >= 2, p % 2 == 0))
    def _():
        step(z_ref[1], 0)                         # even p: read slot 1, write slot 0

    @pl.when(jnp.logical_and(p >= 2, p % 2 == 1))
    def _():
        step(z_ref[0], 1)                         # odd  p: read slot 0, write slot 1

    # Write the running partial sum every step; the last visit (p == K-1) leaves the
    # final aggregation in HBM.  The outer aggregation relu is mathematically redundant
    # (sum of non-negative terms).
    o_ref[...] = acc_ref[rows, :].astype(o_ref.dtype)


def _pick_tile_n(n, target=512):
    """Largest row tile (multiple of 8, <= target) that divides n; else the full n."""
    if n <= target or n % 8 != 0:
        return n
    t = target
    while t >= 8:
        if n % t == 0:
            return t
        t //= 2
    return n


def snn_layer_prepare(laplacian, weights, compute_dtype=jnp.bfloat16):
    """One-time (per parameter set) prep: cast L, zero-pad W to a lane-dense Cout.

    Hoisted out of the per-call hot path so repeated forward calls do not re-read the
    full N^2 Laplacian just to cast it.
    """
    K, Cin, Cout = weights.shape
    cout_pad = ((Cout + 127) // 128) * 128
    w_pad = jnp.zeros((K, Cin, cout_pad), compute_dtype)
    w_pad = w_pad.at[:, :, :Cout].set(weights.astype(compute_dtype))
    return laplacian.astype(compute_dtype), w_pad, Cout


def snn_layer_apply(x, lap_c, w_pad, out_channels, *, tile_n=None):
    """x: [N, Cin] -> [N, out_channels] (f32).  lap_c / w_pad from snn_layer_prepare."""
    N, Cin = x.shape
    K, _, cout_pad = w_pad.shape
    cdt = lap_c.dtype
    item = jnp.dtype(cdt).itemsize

    if tile_n is None:
        tile_n = _pick_tile_n(N)
    tile_n = min(int(tile_n), N)
    if (N % tile_n != 0) or (tile_n % 8 != 0 and tile_n != N):
        tile_n = N
    num_tiles = N // tile_n

    # VMEM budget: double-buffered L slab + resident x + z ping-pong + f32 acc
    # + W block + double-buffered output tile, with headroom.
    vmem_bytes = (2 * tile_n * N * item + 2 * N * Cin * item + 2 * N * Cin * item
                  + N * cout_pad * 4 + 2 * Cin * cout_pad * item
                  + 2 * tile_n * cout_pad * 4)
    vmem_limit = int(min(max(vmem_bytes * 5 // 4 + (2 << 20), 16 << 20), 96 << 20))

    flops = 2 * max(K - 1, 0) * N * N * Cin + 2 * K * N * Cin * cout_pad
    bytes_accessed = (max(K - 1, 1) * N * N * item          # dominant: L stream
                      + N * Cin * item + K * Cin * cout_pad * item
                      + N * cout_pad * 4)

    out = pl.pallas_call(
        functools.partial(_snn_kernel, tile_n=tile_n),
        grid=(K, num_tiles),
        out_shape=jax.ShapeDtypeStruct((N, cout_pad), jnp.float32),
        in_specs=[
            # x: single full block, constant index -> DMA'd once, VMEM-resident.
            pl.BlockSpec((N, Cin), lambda p, i: (0, 0)),
            # L: row slab i; while p == 0 the slab is unused, so collapse its index to
            # block (0, 0) (only one slab fetched) -> L streamed exactly K-1 times.
            pl.BlockSpec((tile_n, N), lambda p, i: (i * jnp.minimum(p, 1), 0)),
            # W_p: one degree's weight per p step (leading dim squeezed).
            pl.BlockSpec((None, Cin, cout_pad), lambda p, i: (p, 0, 0)),
        ],
        out_specs=pl.BlockSpec((tile_n, cout_pad), lambda p, i: (i, 0)),
        scratch_shapes=[
            pltpu.VMEM((2, N, Cin), cdt),              # z ping-pong (z_{p-1} / z_p)
            pltpu.VMEM((N, cout_pad), jnp.float32),    # running aggregation
        ],
        compiler_params=pltpu.CompilerParams(
            # Row-tile axis must stay "arbitrary": each tile of degree p reads the full
            # z_{p-1} scratch written by all tiles of degree p-1 (see TODO above).
            dimension_semantics=("arbitrary", "arbitrary"),
            vmem_limit_bytes=vmem_limit,
        ),
        cost_estimate=pl.CostEstimate(
            flops=int(flops), transcendentals=0, bytes_accessed=int(bytes_accessed)),
    )(x.astype(cdt), lap_c, w_pad)

    return out[:, :out_channels]


def snn_layer_forward(x, laplacian, weights, *, compute_dtype=jnp.bfloat16, tile_n=None):
    """Convenience wrapper (prepare + apply).  weights: [K, Cin, Cout] -> [N, Cout] f32."""
    lap_c, w_pad, cout = snn_layer_prepare(laplacian, weights, compute_dtype)
    return snn_layer_apply(x, lap_c, w_pad, cout, tile_n=tile_n)


def _reference(x, laplacian, weights):
    """Pure-JAX reference matching the PyTorch SNNLayer semantics exactly."""
    N = laplacian.shape[0]
    K = weights.shape[0]
    hp = jax.lax.Precision.HIGHEST
    lp = jnp.eye(N, dtype=jnp.float32)
    acc = jnp.zeros((x.shape[0], weights.shape[-1]), jnp.float32)
    for p in range(K):
        y = jnp.matmul(lp, jnp.matmul(x, weights[p], precision=hp), precision=hp)
        acc = acc + jax.nn.relu(y)
        lp = jnp.matmul(lp, laplacian, precision=hp)
    return jax.nn.relu(acc)


def _xavier_uniform(key, shape, gain=1.414):
    fan_in, fan_out = shape[-2], shape[-1]
    limit = gain * np.sqrt(6.0 / (fan_in + fan_out))
    return jax.random.uniform(key, shape, jnp.float32, -limit, limit)


if __name__ == "__main__":
    # Small, module-consistent shapes (n_simplices, in_channels, out_channels, K).
    N, Cin, Cout, K = 256, 16, 32, 3

    key = jax.random.PRNGKey(0)
    kx, kl, kw = jax.random.split(key, 3)

    x = jax.random.normal(kx, (N, Cin), jnp.float32)
    # Symmetric dense "Laplacian-like" matrix (semantics only depend on the matmuls).
    a = jax.random.normal(kl, (N, N), jnp.float32) * 0.08
    laplacian = (a + a.T) * 0.5
    # Per-degree conv weights, deterministic xavier-uniform init (as in topomodelx Conv).
    weights = jnp.stack(
        [_xavier_uniform(k, (Cin, Cout)) for k in jax.random.split(kw, K)])

    ref = _reference(x, laplacian, weights)

    # f32 path, multi-row-tile grid (K, 2): near-exact vs the HIGHEST-precision reference.
    out_f32 = jax.block_until_ready(
        snn_layer_forward(x, laplacian, weights, compute_dtype=jnp.float32, tile_n=128))
    np.testing.assert_allclose(np.asarray(out_f32), np.asarray(ref), rtol=1e-3, atol=1e-3)

    # Default bf16-operand / f32-accumulate path (halves the dominant L HBM stream),
    # exercising 4 row tiles and the z ping-pong; loose tolerance vs the f32 reference.
    out_bf16 = jax.block_until_ready(snn_layer_forward(x, laplacian, weights, tile_n=64))
    np.testing.assert_allclose(np.asarray(out_bf16), np.asarray(ref), rtol=1e-1, atol=3e-1)

    print("KERNEL_OK")
</pallas_src>

<mosaic_0001>
module attributes {stable_mosaic.version = 11 : i64} {
  func.func @_snn_kernel(%arg0: i32, %arg1: i32, %arg2: memref<256x16xf32, #tpu.memory_space<vmem>>, %arg3: memref<128x256xf32, #tpu.memory_space<vmem>>, %arg4: memref<1x16x128xf32, #tpu.memory_space<vmem>>, %arg5: memref<128x128xf32, #tpu.memory_space<vmem>>, %arg6: memref<2x256x16xf32, #tpu.memory_space<vmem>>, %arg7: memref<256x128xf32, #tpu.memory_space<vmem>>) attributes {dimension_semantics = [#tpu.dimension_semantics<arbitrary>, #tpu.dimension_semantics<arbitrary>], iteration_bounds = array<i64: 3, 2>, scalar_prefetch = 0 : i64, scratch_operands = 2 : i64, tpu.core_type = #tpu.core_type<tc>, window_params = [{pipeline_mode = #tpu.pipeline_mode<synchronous>, transform_indices = @transform_0, window_bounds = array<i64: 256, 16>}, {transform_indices = @transform_1, window_bounds = array<i64: 128, 256>}, {transform_indices = @transform_2, window_bounds = array<i64: 1, 16, 128>}, {transform_indices = @transform_3, window_bounds = array<i64: 128, 128>}]} {
    %c128_i32 = arith.constant 128 : i32
    %0 = arith.muli %arg1, %c128_i32 : i32
    %1 = tpu.assume_multiple %0, 128 : i32
    %c0_i32 = arith.constant 0 : i32
    %2 = arith.cmpi eq, %arg0, %c0_i32 : i32
    %3 = arith.extui %2 : i1 to i32
    %c0_i32_0 = arith.constant 0 : i32
    %4 = arith.cmpi ne, %3, %c0_i32_0 : i32
    scf.if %4 {
      %41 = arith.index_cast %1 : i32 to index
      %c0_21 = arith.constant 0 : index
      %42 = vector.load %arg2[%41, %c0_21] : memref<256x16xf32, #tpu.memory_space<vmem>>, vector<128x16xf32>
      %c0_22 = arith.constant 0 : index
      %c0_23 = arith.constant 0 : index
      %c0_24 = arith.constant 0 : index
      %43 = vector.load %arg4[%c0_22, %c0_23, %c0_24] : memref<1x16x128xf32, #tpu.memory_space<vmem>>, vector<1x16x128xf32>
      %44 = vector.shape_cast %43 : vector<1x16x128xf32> to vector<16x128xf32>
      %cst = arith.constant dense<0.000000e+00> : vector<128x128xf32>
      %45 = tpu.matmul %42, %44, %cst {dimension_numbers = #tpu.dot_dimension_numbers<[1], [0], [0], [1], [0, 0, 1, 1], [], []>} : vector<128x16xf32>, vector<16x128xf32>, vector<128x128xf32> -> vector<128x128xf32>
      %cst_25 = arith.constant 0.000000e+00 : f32
      %46 = vector.broadcast %cst_25 : f32 to vector<128x128xf32>
      %47 = arith.maximumf %45, %46 : vector<128x128xf32>
      %48 = arith.index_cast %1 : i32 to index
      %c0_26 = arith.constant 0 : index
      %49 = vector.load %arg7[%48, %c0_26] : memref<256x128xf32, #tpu.memory_space<vmem>>, vector<128x128xf32>
      tpu.vector_store %arg7[%48, %c0_26], %47 {strides = array<i32>} : memref<256x128xf32, #tpu.memory_space<vmem>>, vector<128x128xf32>,
    } else {
    }
    %c1_i32 = arith.constant 1 : i32
    %5 = arith.cmpi eq, %arg0, %c1_i32 : i32
    %6 = arith.extui %5 : i1 to i32
    %c0_i32_1 = arith.constant 0 : i32
    %7 = arith.cmpi ne, %6, %c0_i32_1 : i32
    scf.if %7 {
      %c0_21 = arith.constant 0 : index
      %c0_22 = arith.constant 0 : index
      %41 = vector.load %arg2[%c0_21, %c0_22] : memref<256x16xf32, #tpu.memory_space<vmem>>, vector<256x16xf32>
      %c0_23 = arith.constant 0 : index
      %c0_24 = arith.constant 0 : index
      %42 = vector.load %arg3[%c0_23, %c0_24] : memref<128x256xf32, #tpu.memory_space<vmem>>, vector<128x256xf32>
      %cst = arith.constant dense<0.000000e+00> : vector<128x16xf32>
      %43 = tpu.matmul %42, %41, %cst {dimension_numbers = #tpu.dot_dimension_numbers<[1], [0], [0], [1], [0, 0, 1, 1], [], []>} : vector<128x256xf32>, vector<256x16xf32>, vector<128x16xf32> -> vector<128x16xf32>
      %c1 = arith.constant 1 : index
      %44 = arith.index_cast %1 : i32 to index
      %c0_25 = arith.constant 0 : index
      %45 = vector.load %arg6[%c1, %44, %c0_25] : memref<2x256x16xf32, #tpu.memory_space<vmem>>, vector<1x128x16xf32>
      %46 = vector.shape_cast %45 : vector<1x128x16xf32> to vector<128x16xf32>
      %47 = vector.shape_cast %43 : vector<128x16xf32> to vector<1x128x16xf32>
      tpu.vector_store %arg6[%c1, %44, %c0_25], %47 {strides = array<i32>} : memref<2x256x16xf32, #tpu.memory_space<vmem>>, vector<1x128x16xf32>,
      %48 = arith.index_cast %1 : i32 to index
      %c0_26 = arith.constant 0 : index
      %49 = vector.load %arg7[%48, %c0_26] : memref<256x128xf32, #tpu.memory_space<vmem>>, vector<128x128xf32>
      %c0_27 = arith.constant 0 : index
      %c0_28 = arith.constant 0 : index
      %c0_29 = arith.constant 0 : index
      %50 = vector.load %arg4[%c0_27, %c0_28, %c0_29] : memref<1x16x128xf32, #tpu.memory_space<vmem>>, vector<1x16x128xf32>
      %51 = vector.shape_cast %50 : vector<1x16x128xf32> to vector<16x128xf32>
      %cst_30 = arith.constant dense<0.000000e+00> : vector<128x128xf32>
      %52 = tpu.matmul %43, %51, %cst_30 {dimension_numbers = #tpu.dot_dimension_numbers<[1], [0], [0], [1], [0, 0, 1, 1], [], []>} : vector<128x16xf32>, vector<16x128xf32>, vector<128x128xf32> -> vector<128x128xf32>
      %cst_31 = arith.constant 0.000000e+00 : f32
      %53 = vector.broadcast %cst_31 : f32 to vector<128x128xf32>
      %54 = arith.maximumf %52, %53 : vector<128x128xf32>
      %55 = arith.addf %49, %54 : vector<128x128xf32>
      %56 = arith.index_cast %1 : i32 to index
      %c0_32 = arith.constant 0 : index
      %57 = vector.load %arg7[%56, %c0_32] : memref<256x128xf32, #tpu.memory_space<vmem>>, vector<128x128xf32>
      tpu.vector_store %arg7[%56, %c0_32], %55 {strides = array<i32>} : memref<256x128xf32, #tpu.memory_space<vmem>>, vector<128x128xf32>,
    } else {
    }
    %c2_i32 = arith.constant 2 : i32
    %8 = arith.cmpi sge, %arg0, %c2_i32 : i32
    %c2_i32_2 = arith.constant 2 : i32
    %c0_i32_3 = arith.constant 0 : i32
    %9 = arith.cmpi eq, %c2_i32_2, %c0_i32_3 : i32
    %c1_i32_4 = arith.constant 1 : i32
    %10 = arith.select %9, %c1_i32_4, %c2_i32_2 : i32
    %11 = arith.remsi %arg0, %10 : i32
    %c0_i32_5 = arith.constant 0 : i32
    %12 = arith.cmpi ne, %11, %c0_i32_5 : i32
    %c0_i32_6 = arith.constant 0 : i32
    %13 = arith.cmpi slt, %11, %c0_i32_6 : i32
    %c0_i32_7 = arith.constant 0 : i32
    %14 = arith.cmpi slt, %10, %c0_i32_7 : i32
    %15 = arith.xori %13, %14 : i1
    %16 = arith.andi %15, %12 : i1
    %17 = arith.addi %11, %10 : i32
    %18 = arith.select %16, %17, %11 : i32
    %c0_i32_8 = arith.constant 0 : i32
    %19 = arith.cmpi eq, %18, %c0_i32_8 : i32
    %20 = arith.andi %8, %19 : i1
    %21 = arith.extui %20 : i1 to i32
    %c0_i32_9 = arith.constant 0 : i32
    %22 = arith.cmpi ne, %21, %c0_i32_9 : i32
    scf.if %22 {
      %c1 = arith.constant 1 : index
      %c0_21 = arith.constant 0 : index
      %c0_22 = arith.constant 0 : index
      %41 = vector.load %arg6[%c1, %c0_21, %c0_22] : memref<2x256x16xf32, #tpu.memory_space<vmem>>, vector<1x256x16xf32>
      %42 = vector.shape_cast %41 : vector<1x256x16xf32> to vector<256x16xf32>
      %c0_23 = arith.constant 0 : index
      %c0_24 = arith.constant 0 : index
      %43 = vector.load %arg3[%c0_23, %c0_24] : memref<128x256xf32, #tpu.memory_space<vmem>>, vector<128x256xf32>
      %cst = arith.constant dense<0.000000e+00> : vector<128x16xf32>
      %44 = tpu.matmul %43, %42, %cst {dimension_numbers = #tpu.dot_dimension_numbers<[1], [0], [0], [1], [0, 0, 1, 1], [], []>} : vector<128x256xf32>, vector<256x16xf32>, vector<128x16xf32> -> vector<128x16xf32>
      %c0_25 = arith.constant 0 : index
      %45 = arith.index_cast %1 : i32 to index
      %c0_26 = arith.constant 0 : index
      %46 = vector.load %arg6[%c0_25, %45, %c0_26] : memref<2x256x16xf32, #tpu.memory_space<vmem>>, vector<1x128x16xf32>
      %47 = vector.shape_cast %46 : vector<1x128x16xf32> to vector<128x16xf32>
      %48 = vector.shape_cast %44 : vector<128x16xf32> to vector<1x128x16xf32>
      tpu.vector_store %arg6[%c0_25, %45, %c0_26], %48 {strides = array<i32>} : memref<2x256x16xf32, #tpu.memory_space<vmem>>, vector<1x128x16xf32>,
      %49 = arith.index_cast %1 : i32 to index
      %c0_27 = arith.constant 0 : index
      %50 = vector.load %arg7[%49, %c0_27] : memref<256x128xf32, #tpu.memory_space<vmem>>, vector<128x128xf32>
      %c0_28 = arith.constant 0 : index
      %c0_29 = arith.constant 0 : index
      %c0_30 = arith.constant 0 : index
      %51 = vector.load %arg4[%c0_28, %c0_29, %c0_30] : memref<1x16x128xf32, #tpu.memory_space<vmem>>, vector<1x16x128xf32>
      %52 = vector.shape_cast %51 : vector<1x16x128xf32> to vector<16x128xf32>
      %cst_31 = arith.constant dense<0.000000e+00> : vector<128x128xf32>
      %53 = tpu.matmul %44, %52, %cst_31 {dimension_numbers = #tpu.dot_dimension_numbers<[1], [0], [0], [1], [0, 0, 1, 1], [], []>} : vector<128x16xf32>, vector<16x128xf32>, vector<128x128xf32> -> vector<128x128xf32>
      %cst_32 = arith.constant 0.000000e+00 : f32
      %54 = vector.broadcast %cst_32 : f32 to vector<128x128xf32>
      %55 = arith.maximumf %53, %54 : vector<128x128xf32>
      %56 = arith.addf %50, %55 : vector<128x128xf32>
      %57 = arith.index_cast %1 : i32 to index
      %c0_33 = arith.constant 0 : index
      %58 = vector.load %arg7[%57, %c0_33] : memref<256x128xf32, #tpu.memory_space<vmem>>, vector<128x128xf32>
      tpu.vector_store %arg7[%57, %c0_33], %56 {strides = array<i32>} : memref<256x128xf32, #tpu.memory_space<vmem>>, vector<128x128xf32>,
    } else {
    }
    %c2_i32_10 = arith.constant 2 : i32
    %23 = arith.cmpi sge, %arg0, %c2_i32_10 : i32
    %c2_i32_11 = arith.constant 2 : i32
    %c0_i32_12 = arith.constant 0 : i32
    %24 = arith.cmpi eq, %c2_i32_11, %c0_i32_12 : i32
    %c1_i32_13 = arith.constant 1 : i32
    %25 = arith.select %24, %c1_i32_13, %c2_i32_11 : i32
    %26 = arith.remsi %arg0, %25 : i32
    %c0_i32_14 = arith.constant 0 : i32
    %27 = arith.cmpi ne, %26, %c0_i32_14 : i32
    %c0_i32_15 = arith.constant 0 : i32
    %28 = arith.cmpi slt, %26, %c0_i32_15 : i32
    %c0_i32_16 = arith.constant 0 : i32
    %29 = arith.cmpi slt, %25, %c0_i32_16 : i32
    %30 = arith.xori %28, %29 : i1
    %31 = arith.andi %30, %27 : i1
    %32 = arith.addi %26, %25 : i32
    %33 = arith.select %31, %32, %26 : i32
    %c1_i32_17 = arith.constant 1 : i32
    %34 = arith.cmpi eq, %33, %c1_i32_17 : i32
    %35 = arith.andi %23, %34 : i1
    %36 = arith.extui %35 : i1 to i32
    %c0_i32_18 = arith.constant 0 : i32
    %37 = arith.cmpi ne, %36, %c0_i32_18 : i32
    scf.if %37 {
      %c0_21 = arith.constant 0 : index
      %c0_22 = arith.constant 0 : index
      %c0_23 = arith.constant 0 : index
      %41 = vector.load %arg6[%c0_21, %c0_22, %c0_23] : memref<2x256x16xf32, #tpu.memory_space<vmem>>, vector<1x256x16xf32>
      %42 = vector.shape_cast %41 : vector<1x256x16xf32> to vector<256x16xf32>
      %c0_24 = arith.constant 0 : index
      %c0_25 = arith.constant 0 : index
      %43 = vector.load %arg3[%c0_24, %c0_25] : memref<128x256xf32, #tpu.memory_space<vmem>>, vector<128x256xf32>
      %cst = arith.constant dense<0.000000e+00> : vector<128x16xf32>
      %44 = tpu.matmul %43, %42, %cst {dimension_numbers = #tpu.dot_dimension_numbers<[1], [0], [0], [1], [0, 0, 1, 1], [], []>} : vector<128x256xf32>, vector<256x16xf32>, vector<128x16xf32> -> vector<128x16xf32>
      %c1 = arith.constant 1 : index
      %45 = arith.index_cast %1 : i32 to index
      %c0_26 = arith.constant 0 : index
      %46 = vector.load %arg6[%c1, %45, %c0_26] : memref<2x256x16xf32, #tpu.memory_space<vmem>>, vector<1x128x16xf32>
      %47 = vector.shape_cast %46 : vector<1x128x16xf32> to vector<128x16xf32>
      %48 = vector.shape_cast %44 : vector<128x16xf32> to vector<1x128x16xf32>
      tpu.vector_store %arg6[%c1, %45, %c0_26], %48 {strides = array<i32>} : memref<2x256x16xf32, #tpu.memory_space<vmem>>, vector<1x128x16xf32>,
      %49 = arith.index_cast %1 : i32 to index
      %c0_27 = arith.constant 0 : index
      %50 = vector.load %arg7[%49, %c0_27] : memref<256x128xf32, #tpu.memory_space<vmem>>, vector<128x128xf32>
      %c0_28 = arith.constant 0 : index
      %c0_29 = arith.constant 0 : index
      %c0_30 = arith.constant 0 : index
      %51 = vector.load %arg4[%c0_28, %c0_29, %c0_30] : memref<1x16x128xf32, #tpu.memory_space<vmem>>, vector<1x16x128xf32>
      %52 = vector.shape_cast %51 : vector<1x16x128xf32> to vector<16x128xf32>
      %cst_31 = arith.constant dense<0.000000e+00> : vector<128x128xf32>
      %53 = tpu.matmul %44, %52, %cst_31 {dimension_numbers = #tpu.dot_dimension_numbers<[1], [0], [0], [1], [0, 0, 1, 1], [], []>} : vector<128x16xf32>, vector<16x128xf32>, vector<128x128xf32> -> vector<128x128xf32>
      %cst_32 = arith.constant 0.000000e+00 : f32
      %54 = vector.broadcast %cst_32 : f32 to vector<128x128xf32>
      %55 = arith.maximumf %53, %54 : vector<128x128xf32>
      %56 = arith.addf %50, %55 : vector<128x128xf32>
      %57 = arith.index_cast %1 : i32 to index
      %c0_33 = arith.constant 0 : index
      %58 = vector.load %arg7[%57, %c0_33] : memref<256x128xf32, #tpu.memory_space<vmem>>, vector<128x128xf32>
      tpu.vector_store %arg7[%57, %c0_33], %56 {strides = array<i32>} : memref<256x128xf32, #tpu.memory_space<vmem>>, vector<128x128xf32>,
    } else {
    }
    %38 = arith.index_cast %1 : i32 to index
    %c0 = arith.constant 0 : index
    %39 = vector.load %arg7[%38, %c0] : memref<256x128xf32, #tpu.memory_space<vmem>>, vector<128x128xf32>
    %c0_19 = arith.constant 0 : index
    %c0_20 = arith.constant 0 : index
    %40 = vector.load %arg5[%c0_19, %c0_20] : memref<128x128xf32, #tpu.memory_space<vmem>>, vector<128x128xf32>
    tpu.vector_store %arg5[%c0_19, %c0_20], %39 {strides = array<i32>} : memref<128x128xf32, #tpu.memory_space<vmem>>, vector<128x128xf32>,
    return
  }
  func.func @transform_0(%arg0: i32, %arg1: i32) -> (i32, i32) {
    %c0_i32 = arith.constant 0 : i32
    %c0_i32_0 = arith.constant 0 : i32
    %c0_i32_1 = arith.constant 0 : i32
    return %c0_i32, %c0_i32_0 : i32, i32
  }
  func.func @transform_1(%arg0: i32, %arg1: i32) -> (i32, i32) {
    %c1_i32 = arith.constant 1 : i32
    %0 = arith.minsi %arg0, %c1_i32 : i32
    %1 = arith.muli %arg1, %0 : i32
    %c0_i32 = arith.constant 0 : i32
    %c0_i32_0 = arith.constant 0 : i32
    return %1, %c0_i32 : i32, i32
  }
  func.func @transform_2(%arg0: i32, %arg1: i32) -> (i32, i32, i32) {
    %c0_i32 = arith.constant 0 : i32
    %c0_i32_0 = arith.constant 0 : i32
    %c0_i32_1 = arith.constant 0 : i32
    return %arg0, %c0_i32, %c0_i32_0 : i32, i32, i32
  }
  func.func @transform_3(%arg0: i32, %arg1: i32) -> (i32, i32) {
    %c0_i32 = arith.constant 0 : i32
    %c0_i32_0 = arith.constant 0 : i32
    return %arg1, %c0_i32 : i32, i32
  }
}

</mosaic_0001>

<llo_original>
// kernel: tpu_custom_call.1
$region0: #{tpu_custom_call.1}
  #allocation0 [shape = 'u32[]', space=smem, size = 0x4, offset = 0x4, fixed_abs, tag = 'smem constant byte address 0x4 - core index']
  #allocation1 [shape = 'u32[144,128]{1,0:T(1,128)}', space=vmem, size = 0x12000, scoped, tag = 'internal scratch']
  #allocation2 [shape = 'f32[2,256,16]{2,1,0:T(8,128)}', space=vmem, size = 0x40000, scoped, tag = 'scratch operand']
  #allocation3 [shape = 'f32[256,128]{1,0:T(8,128)}', space=vmem, size = 0x20000, scoped, tag = 'scratch operand']
  %s0 = inlined_call_operand.vmem [shape: f32[256,16], index: 0, kind: input, shape index: {}]
  %s1 = inlined_call_operand.hbm [shape: f32[256,256], index: 1, kind: input, shape index: {}]
  %s2 = inlined_call_operand.vmem [shape: f32[3,16,128], index: 2, kind: input, shape index: {}]
  %s3 = inlined_call_operand.hbm [shape: f32[256,128], index: 3, kind: output, shape index: {}]
  %s4 = sld [smem:[#allocation0]]
  $region65: #{tpu_custom_call.1} parent=0
    _
  %s6 = ssub.s32 1, %s4
  %s7 = scalar_select 0, %s6, %s4
  $region1: #{tpu_custom_call.1} parent=0
    #allocation4 [shape = 'u8[262144]{0}', space=vmem, size = 0x40000, scoped, tag = 'input window, operand 1']
    #allocation5 [shape = 's32[2]{0}', space=sflag, size = 0x8, scoped, tag = 'scoped memory for tpu_custom_call.1']
    #allocation6 [shape = 's32[2]{0}', space=sflag, size = 0x8, scoped, tag = 'scoped memory for tpu_custom_call.1']
    #allocation7 [shape = 'u8[131072]{0}', space=vmem, size = 0x20000, scoped, tag = 'output window, operand 0']
    %8 = vsyncpa [#allocation5], 0
    %s9 = scalar_lea.sflag [#allocation5], 1
    %10 = vsyncpa %s9, 0
    %11 = vsyncpa [#allocation6], 0
    %s12 = scalar_lea.sflag [#allocation6], 1
    %13 = vsyncpa %s12, 0
    loop: start=0, step=1, limit=8
    $region2: #{tpu_custom_call.1} parent=1 // loop_pre_header
      _
    $region3: #{tpu_custom_call.1} parent=1 // loop_header
      %s15 = sphi 0, %s19
      %p16 = scmp.ge.s32.totalorder %s15, 8
      %s22 = sphi 0, %s34
      %s23 = sphi 0, %s30
      %s24 = sphi 0, %s22
      %s25 = sphi 0, %s23
      %s26 = sphi 0, %s24
      %s27 = sphi 0, %s25
      %s35 = sphi 0, %s35
      %s37 = sphi 0, %s35
      %s38 = sphi 0, %s37
      %s52 = sphi 0, %s38
      %s64 = sphi 0, %s66
      %s67 = sphi 0, %s64
      %s68 = sphi 0, %s67
      %s84 = sphi 0, %s68
      %s90 = sphi 0, %s92
      %s93 = sphi 0, %s90
      %s94 = sphi 0, %s93
      %s110 = sphi 0, %s94
      %s116 = sphi 0, %s118
      %s119 = sphi 0, %s116
      %s120 = sphi 0, %s119
      %s136 = sphi 0, %s120
    $region4: #{tpu_custom_call.1} parent=1 // loop_header_branch
      %18 = sbr.rel (%p16) target = $region8
    $region5: #{tpu_custom_call.1} parent=1 // loop_body
      %s20 = ssub.s32 %s15, 1
      %s21 = ssub.s32 %s15, 2
      %s28 = sadd.s32 1, %s23
      %p29 = scmp.ge.s32.totalorder %s28, 2
      %s30 = scalar_select %p29, 0, %s28
      %s31 = sadd.s32 1, %s22
      %s32 = scalar_select %p29, %s31, %s22
      %p33 = scmp.ge.s32.totalorder %s32, 3
      %s34 = scalar_select %p33, 0, %s32
      %s36 = sadd.s32 %s35, 1
      %p39 = scmp.eq.s32.totalorder %s15, 5
      %p40 = scmp.ne.s32.totalorder %s35, %s37
      %p41 = scmp.eq.s32.totalorder %s15, 0
      %p42 = por %p40, %p41
      %p43 = scmp.ne.s32.totalorder %s35, %s37
      %p44 = scmp.eq.s32.totalorder %s20, 5
      %p45 = por %p43, %p44
      %p46 = scmp.ne.s32.totalorder %s37, %s38
      %p47 = scmp.eq.s32.totalorder %s20, 0
      %p48 = por %p46, %p47
      %p49 = scmp.ne.s32.totalorder %s37, %s38
      %p50 = scmp.eq.s32.totalorder %s21, 5
      %p51 = por %p49, %p50
      %p53 = scmp.ne.s32.totalorder %s38, %s52
      %p54 = scmp.eq.s32.totalorder %s21, 0
      %p55 = por %p53, %p54
      %p56 = scmp.lt.s32.totalorder %s22, 1
      %s57 = scalar_select %p56, %s22, 1
      %s58 = smul.u32 %s23, %s57
      %p59 = scmp.lt.s32.totalorder %s34, 1
      %s60 = scalar_select %p59, %s34, 1
      %s61 = smul.u32 %s30, %s60
      %s62 = ssub.s32 %s58, %s61
      %p63 = scmp.eq.s32.totalorder %s62, 0
      %s65 = sadd.s32 %s64, 1
      %s66 = scalar_select %p63, %s64, %s65
      %p69 = pneg %p63
      %p70 = scmp.eq.s32.totalorder %s15, 5
      %p71 = por %p69, %p70
      %p72 = scmp.ne.s32.totalorder %s64, %s67
      %p73 = scmp.eq.s32.totalorder %s15, 0
      %p74 = por %p72, %p73
      %p75 = scmp.ne.s32.totalorder %s64, %s67
      %p76 = scmp.eq.s32.totalorder %s20, 5
      %p77 = por %p75, %p76
      %p78 = scmp.ne.s32.totalorder %s67, %s68
      %p79 = scmp.eq.s32.totalorder %s20, 0
      %p80 = por %p78, %p79
      %p81 = scmp.ne.s32.totalorder %s67, %s68
      %p82 = scmp.eq.s32.totalorder %s21, 5
      %p83 = por %p81, %p82
      %p85 = scmp.ne.s32.totalorder %s68, %s84
      %p86 = scmp.eq.s32.totalorder %s21, 0
      %p87 = por %p85, %p86
      %s88 = ssub.s32 %s22, %s34
      %p89 = scmp.eq.s32.totalorder %s88, 0
      %s91 = sadd.s32 %s90, 1
      %s92 = scalar_select %p89, %s90, %s91
      %p95 = pneg %p89
      %p96 = scmp.eq.s32.totalorder %s15, 5
      %p97 = por %p95, %p96
      %p98 = scmp.ne.s32.totalorder %s90, %s93
      %p99 = scmp.eq.s32.totalorder %s15, 0
      %p100 = por %p98, %p99
      %p101 = scmp.ne.s32.totalorder %s90, %s93
      %p102 = scmp.eq.s32.totalorder %s20, 5
      %p103 = por %p101, %p102
      %p104 = scmp.ne.s32.totalorder %s93, %s94
      %p105 = scmp.eq.s32.totalorder %s20, 0
      %p106 = por %p104, %p105
      %p107 = scmp.ne.s32.totalorder %s93, %s94
      %p108 = scmp.eq.s32.totalorder %s21, 5
      %p109 = por %p107, %p108
      %p111 = scmp.ne.s32.totalorder %s94, %s110
      %p112 = scmp.eq.s32.totalorder %s21, 0
      %p113 = por %p111, %p112
      %s114 = ssub.s32 %s23, %s30
      %p115 = scmp.eq.s32.totalorder %s114, 0
      %s117 = sadd.s32 %s116, 1
      %s118 = scalar_select %p115, %s116, %s117
      %p121 = pneg %p115
      %p122 = scmp.eq.s32.totalorder %s15, 5
      %p123 = por %p121, %p122
      %p124 = scmp.ne.s32.totalorder %s116, %s119
      %p125 = scmp.eq.s32.totalorder %s15, 0
      %p126 = por %p124, %p125
      %p127 = scmp.ne.s32.totalorder %s116, %s119
      %p128 = scmp.eq.s32.totalorder %s20, 5
      %p129 = por %p127, %p128
      %p130 = scmp.ne.s32.totalorder %s119, %s120
      %p131 = scmp.eq.s32.totalorder %s20, 0
      %p132 = por %p130, %p131
      %p133 = scmp.ne.s32.totalorder %s119, %s120
      %p134 = scmp.eq.s32.totalorder %s21, 5
      %p135 = por %p133, %p134
      %p137 = scmp.ne.s32.totalorder %s120, %s136
      %p138 = scmp.eq.s32.totalorder %s21, 0
      %p139 = por %p137, %p138
      %p140 = scmp.le.s32.totalorder 1, %s15
      %p141 = scmp.lt.s32.totalorder %s15, 7
      %p142 = pnand %p140, %p141
      %p143 = pneg %p142
      // Predicated region
      $region9: #{tpu_custom_call.1} parent=5 // pred_check
        _
      $region10: #{tpu_custom_call.1} parent=5 // pred_check_branch
        %145 = sbr.rel (%p142) target = $region12
      $region11: #{tpu_custom_call.1} parent=5 // pred_region
        %s146 = ssub.s32 %s15, 1
        // Predicated region
        $region13: #{tpu_custom_call.1} parent=11 // pred_check
          %p147 = pneg %p48
        $region14: #{tpu_custom_call.1} parent=11 // pred_check_branch
          %149 = sbr.rel (%p147) target = $region16
        $region15: #{tpu_custom_call.1} parent=11 // pred_region
          _
        $region16: #{tpu_custom_call.1} parent=11 // pred_fallthru
          _
      $region12: #{tpu_custom_call.1} parent=5 // pred_fallthru
        _
      %p150 = scmp.lt.s32.totalorder %s15, 6
      // Predicated region
      $region17: #{tpu_custom_call.1} parent=5 // pred_check
        %p151 = pneg %p150
      $region18: #{tpu_custom_call.1} parent=5 // pred_check_branch
        %153 = sbr.rel (%p151) target = $region20
      $region19: #{tpu_custom_call.1} parent=5 // pred_region
        // Predicated region
        $region21: #{tpu_custom_call.1} parent=19 // pred_check
          %p154 = pneg %p74
        $region22: #{tpu_custom_call.1} parent=19 // pred_check_branch
          %156 = sbr.rel (%p154) target = $region24
        $region23: #{tpu_custom_call.1} parent=19 // pred_region
          %s157 = sand.u32 %s64, 1
          %s158 = scalar_lea.sflag [#allocation5], %s157
          %s159 = sand.u32 %s64, 1
          %s160 = smul.addr %s159, 256
          %s161 = scalar_lea.vmem [#allocation4], %s160
          %p162 = scmp.lt.s32.totalorder %s22, 1
          %s163 = scalar_select %p162, %s22, 1
          %s164 = smul.u32 %s23, %s163
          %s165 = smul.u32 16, %s164
          %s167 = ssub.s32 4096, 4096
          %168 = vsyncadd %s158, %s167
          %s169 = smul.addr %s165, 2
          %s170 = smul.addr %s169, 128
          %s171 = scalar_lea.hbm %s1, %s170
          %s172 = sshll.u32 %s161, 4
          %s173 = int_to_ptr.vmem [resolvable:$true] %s172
          %178 = dma.hbm_to_vmem [thread:$0]  %s171, 4096, %s173, %s158, 256, 256, 16
        $region24: #{tpu_custom_call.1} parent=19 // pred_fallthru
          _
        // Predicated region
        $region25: #{tpu_custom_call.1} parent=19 // pred_check
          %p179 = pneg %p100
        $region26: #{tpu_custom_call.1} parent=19 // pred_check_branch
          %181 = sbr.rel (%p179) target = $region28
        $region27: #{tpu_custom_call.1} parent=19 // pred_region
          %p182 = scmp.lt.s32.totalorder %s22, 2
          %s183 = scalar_select %p182, %s22, 2
          %s184 = smul.addr %s183, 2
          %s185 = smul.addr %s184, 8
          %s186 = scalar_lea.vmem %s2, %s185
        $region28: #{tpu_custom_call.1} parent=19 // pred_fallthru
          _
      $region20: #{tpu_custom_call.1} parent=5 // pred_fallthru
        _
      %p187 = scmp.le.s32.totalorder 1, %s15
      %p188 = scmp.lt.s32.totalorder %s15, 7
      %p189 = pnand %p187, %p188
      %p190 = pneg %p189
      // Predicated region
      $region29: #{tpu_custom_call.1} parent=5 // pred_check
        _
      $region30: #{tpu_custom_call.1} parent=5 // pred_check_branch
        %192 = sbr.rel (%p189) target = $region32
      $region31: #{tpu_custom_call.1} parent=5 // pred_region
        %s193 = ssub.s32 %s15, 1
        %s194 = sand.u32 %s67, 1
        %s195 = scalar_lea.sflag [#allocation5], %s194
        %s196 = sand.u32 %s67, 1
        %s197 = smul.addr %s196, 256
        %s198 = scalar_lea.vmem [#allocation4], %s197
        // Predicated region
        $region33: #{tpu_custom_call.1} parent=31 // pred_check
          %p199 = pneg %p80
        $region34: #{tpu_custom_call.1} parent=31 // pred_check_branch
          %201 = sbr.rel (%p199) target = $region36
        $region35: #{tpu_custom_call.1} parent=31 // pred_region
          %202 = dma.done %s195, 4096
        $region36: #{tpu_custom_call.1} parent=31 // pred_fallthru
          _
        %p203 = pneg %p48
        %p204 = pneg %p45
        %s205 = sand.u32 %s67, 1
        %s206 = scalar_lea.sflag [#allocation5], %s205
        %s207 = sand.u32 %s67, 1
        %s208 = smul.addr %s207, 256
        %s209 = scalar_lea.vmem [#allocation4], %s208
        %p210 = pneg %p80
        %p211 = pneg %p77
        %p212 = scmp.lt.s32.totalorder %s24, 2
        %s213 = scalar_select %p212, %s24, 2
        %s214 = smul.addr %s213, 2
        %s215 = smul.addr %s214, 8
        %s216 = scalar_lea.vmem %s2, %s215
        %p217 = pneg %p106
        %p218 = pneg %p103
        %p219 = pneg %p132
        %p220 = pneg %p129
        %s221 = sand.u32 %s119, 1
        %s222 = scalar_lea.sflag [#allocation6], %s221
        %s223 = sand.u32 %s119, 1
        %s224 = smul.addr %s223, 128
        %s225 = scalar_lea.vmem [#allocation7], %s224
        %p226 = scmp.lt.s32.totalorder %s24, 1
        %s227 = scalar_select %p226, %s24, 1
        %s228 = smul.u32 %s25, %s227
        %s229 = smul.u32 16, %s228
        %p230 = scmp.lt.s32.totalorder %s24, 2
        %s231 = scalar_select %p230, %s24, 2
        %s232 = smul.addr %s231, 2
        %s233 = smul.addr %s232, 8
        %s234 = scalar_lea.vmem %s2, %s233
        %s235 = smul.u32 16, %s25
        %s236 = smul.u32 %s25, 128
        %p237 = scmp.eq.s32.totalorder %s24, 0
        // Predicated region
        $region37: #{tpu_custom_call.1} parent=31 // pred_check
          %p238 = pneg %p237
        $region38: #{tpu_custom_call.1} parent=31 // pred_check_branch
          %240 = sbr.rel (%p238) target = $region40
        $region39: #{tpu_custom_call.1} parent=31 // pred_region
          %s241 = scalar_lea.vmem %s0, %s236
          %v242 = vld [vmem:[%s241] sm:$0xff]
          %v243 = vld [vmem:[%s241 + $0x8] sm:$0xff]
          %v244 = vld [vmem:[%s241 + $0x10] sm:$0xff]
          %v245 = vld [vmem:[%s241 + $0x18] sm:$0xff]
          %v246 = vld [vmem:[%s241 + $0x20] sm:$0xff]
          %v247 = vld [vmem:[%s241 + $0x28] sm:$0xff]
          %v248 = vld [vmem:[%s241 + $0x30] sm:$0xff]
          %v249 = vld [vmem:[%s241 + $0x38] sm:$0xff]
          %v250 = vld [vmem:[%s241 + $0x40] sm:$0xff]
          %v251 = vld [vmem:[%s241 + $0x48] sm:$0xff]
          %v252 = vld [vmem:[%s241 + $0x50] sm:$0xff]
          %v253 = vld [vmem:[%s241 + $0x58] sm:$0xff]
          %v254 = vld [vmem:[%s241 + $0x60] sm:$0xff]
          %v255 = vld [vmem:[%s241 + $0x68] sm:$0xff]
          %v256 = vld [vmem:[%s241 + $0x70] sm:$0xff]
          %v257 = vld [vmem:[%s241 + $0x78] sm:$0xff]
          %v258 = vld [vmem:[%s234] sm:$0xff]
          %v259 = vld [vmem:[%s234 + $0x8] sm:$0xff]
          %vm260 = vcmask 130048
          %v262 = vsel %vm260, %v242, 0
          %v265 = vsel %vm260, %v243, 0
          %v268 = vsel %vm260, %v244, 0
          %v271 = vsel %vm260, %v245, 0
          %v274 = vsel %vm260, %v246, 0
          %v277 = vsel %vm260, %v247, 0
          %v280 = vsel %vm260, %v248, 0
          %v283 = vsel %vm260, %v249, 0
          %v286 = vsel %vm260, %v250, 0
          %v289 = vsel %vm260, %v251, 0
          %v292 = vsel %vm260, %v252, 0
          %v295 = vsel %vm260, %v253, 0
          %v298 = vsel %vm260, %v254, 0
          %v301 = vsel %vm260, %v255, 0
          %v304 = vsel %vm260, %v256, 0
          %v307 = vsel %vm260, %v257, 0
          %309 = vmatprep.subr.mxu0 0.0
          %310 = vmatpush1.msra.mxu0 %v258
          %311 = vmatprep.subr.mxu0 0.0
          %312 = vmatpush1.msra.mxu0 %v259
          %313 = vmatprep.subr.mxu0 0.0
          %314 = vmatpush1.msra.mxu0 0.0
          %315 = vmatprep.subr.mxu0 0.0
          %316 = vmatpush1.msra.mxu0 0.0
          %317 = vmatprep.subr.mxu0 0.0
          %318 = vmatpush1.msra.mxu0 0.0
          %319 = vmatprep.subr.mxu0 0.0
          %320 = vmatpush1.msra.mxu0 0.0
          %321 = vmatprep.subr.mxu0 0.0
          %322 = vmatpush1.msra.mxu0 0.0
          %323 = vmatprep.subr.mxu0 0.0
          %324 = vmatpush1.msra.mxu0 0.0
          %325 = vmatprep.subr.mxu0 0.0
          %326 = vmatpush1.msra.mxu0 0.0
          %327 = vmatprep.subr.mxu0 0.0
          %328 = vmatpush1.msra.mxu0 0.0
          %329 = vmatprep.subr.mxu0 0.0
          %330 = vmatpush1.msra.mxu0 0.0
          %331 = vmatprep.subr.mxu0 0.0
          %332 = vmatpush1.msra.mxu0 0.0
          %333 = vmatprep.subr.mxu0 0.0
          %334 = vmatpush1.msra.mxu0 0.0
          %335 = vmatprep.subr.mxu0 0.0
          %336 = vmatpush1.msra.mxu0 0.0
          %337 = vmatprep.subr.mxu0 0.0
          %338 = vmatpush1.msra.mxu0 0.0
          %339 = vmatprep.subr.mxu0 0.0
          %340 = vmatpush1.msra.mxu0 0.0
          %341 = vmatprep.subr.mxu0 0.0
          %342 = vmatpush1.msra.mxu0 0.0
          %343 = vmatprep.subr.mxu0 0.0
          %344 = vmatpush1.msra.mxu0 0.0
          %345 = vmatprep.subr.mxu0 0.0
          %346 = vmatpush1.msra.mxu0 0.0
          %347 = vmatprep.subr.mxu0 0.0
          %348 = vmatpush1.msra.mxu0 0.0
          %349 = vmatprep.subr.mxu0 0.0
          %350 = vmatpush1.msra.mxu0 0.0
          %351 = vmatprep.subr.mxu0 0.0
          %352 = vmatpush1.msra.mxu0 0.0
          %353 = vmatprep.subr.mxu0 0.0
          %354 = vmatpush1.msra.mxu0 0.0
          %355 = vmatprep.subr.mxu0 0.0
          %356 = vmatpush1.msra.mxu0 0.0
          %357 = vmatprep.subr.mxu0 0.0
          %358 = vmatpush1.msra.mxu0 0.0
          %359 = vmatprep.subr.mxu0 0.0
          %360 = vmatpush1.msra.mxu0 0.0
          %361 = vmatprep.subr.mxu0 0.0
          %362 = vmatpush1.msra.mxu0 0.0
          %363 = vmatprep.subr.mxu0 0.0
          %364 = vmatpush1.msra.mxu0 0.0
          %365 = vmatprep.subr.mxu0 0.0
          %366 = vmatpush1.msra.mxu0 0.0
          %367 = vmatprep.subr.mxu0 0.0
          %368 = vmatpush1.msra.mxu0 0.0
          %369 = vmatprep.subr.mxu0 0.0
          %370 = vmatpush1.msra.mxu0 0.0
          %371 = vmatprep.subr.mxu0 0.0
          %372 = vmatpush1.msra.mxu0 0.0
          %373 = vmatprep.mubr.f32.mxu0 0.0
          %374 = vmatmul.mubr.f32.gmra.mrb[0].mxu0 %v262
          %v375 = vpop.f32.mrb[0].mxu0
          %v376 = vadd.f32 0.0, %v375
          %v377 = vpop.f32.mrb[0].mxu0
          %378 = vmatprep.mubr.f32.mxu0 0.0
          %379 = vmatmul.mubr.f32.gmra.mrb[0].mxu0 %v265
          %v380 = vpop.f32.mrb[0].mxu0
          %v381 = vadd.f32 0.0, %v380
          %v382 = vpop.f32.mrb[0].mxu0
          %383 = vmatprep.mubr.f32.mxu0 0.0
          %384 = vmatmul.mubr.f32.gmra.mrb[0].mxu0 %v268
          %v385 = vpop.f32.mrb[0].mxu0
          %v386 = vadd.f32 0.0, %v385
          %v387 = vpop.f32.mrb[0].mxu0
          %388 = vmatprep.mubr.f32.mxu0 0.0
          %389 = vmatmul.mubr.f32.gmra.mrb[0].mxu0 %v271
          %v390 = vpop.f32.mrb[0].mxu0
          %v391 = vadd.f32 0.0, %v390
          %v392 = vpop.f32.mrb[0].mxu0
          %393 = vmatprep.mubr.f32.mxu0 0.0
          %394 = vmatmul.mubr.f32.gmra.mrb[0].mxu0 %v274
          %v395 = vpop.f32.mrb[0].mxu0
          %v396 = vadd.f32 0.0, %v395
          %v397 = vpop.f32.mrb[0].mxu0
          %398 = vmatprep.mubr.f32.mxu0 0.0
          %399 = vmatmul.mubr.f32.gmra.mrb[0].mxu0 %v277
          %v400 = vpop.f32.mrb[0].mxu0
          %v401 = vadd.f32 0.0, %v400
          %v402 = vpop.f32.mrb[0].mxu0
          %403 = vmatprep.mubr.f32.mxu0 0.0
          %404 = vmatmul.mubr.f32.gmra.mrb[0].mxu0 %v280
          %v405 = vpop.f32.mrb[0].mxu0
          %v406 = vadd.f32 0.0, %v405
          %v407 = vpop.f32.mrb[0].mxu0
          %408 = vmatprep.mubr.f32.mxu0 0.0
          %409 = vmatmul.mubr.f32.gmra.mrb[0].mxu0 %v283
          %v410 = vpop.f32.mrb[0].mxu0
          %v411 = vadd.f32 0.0, %v410
          %v412 = vpop.f32.mrb[0].mxu0
          %413 = vmatprep.mubr.f32.mxu0 0.0
          %414 = vmatmul.mubr.f32.gmra.mrb[0].mxu0 %v286
          %v415 = vpop.f32.mrb[0].mxu0
          %v416 = vadd.f32 0.0, %v415
          %v417 = vpop.f32.mrb[0].mxu0
          %418 = vmatprep.mubr.f32.mxu0 0.0
          %419 = vmatmul.mubr.f32.gmra.mrb[0].mxu0 %v289
          %v420 = vpop.f32.mrb[0].mxu0
          %v421 = vadd.f32 0.0, %v420
          %v422 = vpop.f32.mrb[0].mxu0
          %423 = vmatprep.mubr.f32.mxu0 0.0
          %424 = vmatmul.mubr.f32.gmra.mrb[0].mxu0 %v292
          %v425 = vpop.f32.mrb[0].mxu0
          %v426 = vadd.f32 0.0, %v425
          %v427 = vpop.f32.mrb[0].mxu0
          %428 = vmatprep.mubr.f32.mxu0 0.0
          %429 = vmatmul.mubr.f32.gmra.mrb[0].mxu0 %v295
          %v430 = vpop.f32.mrb[0].mxu0
          %v431 = vadd.f32 0.0, %v430
          %v432 = vpop.f32.mrb[0].mxu0
          %433 = vmatprep.mubr.f32.mxu0 0.0
          %434 = vmatmul.mubr.f32.gmra.mrb[0].mxu0 %v298
          %v435 = vpop.f32.mrb[0].mxu0
          %v436 = vadd.f32 0.0, %v435
          %v437 = vpop.f32.mrb[0].mxu0
          %438 = vmatprep.mubr.f32.mxu0 0.0
          %439 = vmatmul.mubr.f32.gmra.mrb[0].mxu0 %v301
          %v440 = vpop.f32.mrb[0].mxu0
          %v441 = vadd.f32 0.0, %v440
          %v442 = vpop.f32.mrb[0].mxu0
          %443 = vmatprep.mubr.f32.mxu0 0.0
          %444 = vmatmul.mubr.f32.gmra.mrb[0].mxu0 %v304
          %v445 = vpop.f32.mrb[0].mxu0
          %v446 = vadd.f32 0.0, %v445
          %v447 = vpop.f32.mrb[0].mxu0
          %448 = vmatprep.mubr.f32.mxu0 0.0
          %449 = vmatmul.mubr.f32.gmra.mrb[0].mxu0 %v307
          %v450 = vpop.f32.mrb[0].mxu0
          %v451 = vadd.f32 0.0, %v450
          %v452 = vpop.f32.mrb[0].mxu0
          %453 = vdwg.mxu0
          %v454 = vmax.f32 %v376, 0.0
          %v455 = vmax.f32 %v381, 0.0
          %v456 = vmax.f32 %v386, 0.0
          %v457 = vmax.f32 %v391, 0.0
          %v458 = vmax.f32 %v396, 0.0
          %v459 = vmax.f32 %v401, 0.0
          %v460 = vmax.f32 %v406, 0.0
          %v461 = vmax.f32 %v411, 0.0
          %v462 = vmax.f32 %v416, 0.0
          %v463 = vmax.f32 %v421, 0.0
          %v464 = vmax.f32 %v426, 0.0
          %v465 = vmax.f32 %v431, 0.0
          %v466 = vmax.f32 %v436, 0.0
          %v467 = vmax.f32 %v441, 0.0
          %v468 = vmax.f32 %v446, 0.0
          %v469 = vmax.f32 %v451, 0.0
          %s470 = scalar_lea.vmem [#allocation3], %s236
          %471 = vst [vmem:[%s470] sm:$0xff] %v454
          %472 = vst [vmem:[%s470 + $0x8] sm:$0xff] %v455
          %473 = vst [vmem:[%s470 + $0x10] sm:$0xff] %v456
          %474 = vst [vmem:[%s470 + $0x18] sm:$0xff] %v457
          %475 = vst [vmem:[%s470 + $0x20] sm:$0xff] %v458
          %476 = vst [vmem:[%s470 + $0x28] sm:$0xff] %v459
          %477 = vst [vmem:[%s470 + $0x30] sm:$0xff] %v460
          %478 = vst [vmem:[%s470 + $0x38] sm:$0xff] %v461
          %479 = vst [vmem:[%s470 + $0x40] sm:$0xff] %v462
          %480 = vst [vmem:[%s470 + $0x48] sm:$0xff] %v463
          %481 = vst [vmem:[%s470 + $0x50] sm:$0xff] %v464
          %482 = vst [vmem:[%s470 + $0x58] sm:$0xff] %v465
          %483 = vst [vmem:[%s470 + $0x60] sm:$0xff] %v466
          %484 = vst [vmem:[%s470 + $0x68] sm:$0xff] %v467
          %485 = vst [vmem:[%s470 + $0x70] sm:$0xff] %v468
          %486 = vst [vmem:[%s470 + $0x78] sm:$0xff] %v469
        $region40: #{tpu_custom_call.1} parent=31 // pred_fallthru
          _
        %p487 = scmp.eq.s32.totalorder %s24, 1
        // Predicated region
        $region41: #{tpu_custom_call.1} parent=31 // pred_check
          %p488 = pneg %p487
        $region42: #{tpu_custom_call.1} parent=31 // pred_check_branch
          %490 = sbr.rel (%p488) target = $region44
        $region43: #{tpu_custom_call.1} parent=31 // pred_region
          %v491 = vld [vmem:[%s0] sm:$0xff]
          %v492 = vld [vmem:[%s0 + $0x8] sm:$0xff]
          %v493 = vld [vmem:[%s0 + $0x10] sm:$0xff]
          %v494 = vld [vmem:[%s0 + $0x18] sm:$0xff]
          %v495 = vld [vmem:[%s0 + $0x20] sm:$0xff]
          %v496 = vld [vmem:[%s0 + $0x28] sm:$0xff]
          %v497 = vld [vmem:[%s0 + $0x30] sm:$0xff]
          %v498 = vld [vmem:[%s0 + $0x38] sm:$0xff]
          %v499 = vld [vmem:[%s0 + $0x40] sm:$0xff]
          %v500 = vld [vmem:[%s0 + $0x48] sm:$0xff]
          %v501 = vld [vmem:[%s0 + $0x50] sm:$0xff]
          %v502 = vld [vmem:[%s0 + $0x58] sm:$0xff]
          %v503 = vld [vmem:[%s0 + $0x60] sm:$0xff]
          %v504 = vld [vmem:[%s0 + $0x68] sm:$0xff]
          %v505 = vld [vmem:[%s0 + $0x70] sm:$0xff]
          %v506 = vld [vmem:[%s0 + $0x78] sm:$0xff]
          %v507 = vld [vmem:[%s0 + $0x80] sm:$0xff]
          %v508 = vld [vmem:[%s0 + $0x88] sm:$0xff]
          %v509 = vld [vmem:[%s0 + $0x90] sm:$0xff]
          %v510 = vld [vmem:[%s0 + $0x98] sm:$0xff]
          %v511 = vld [vmem:[%s0 + $0xa0] sm:$0xff]
          %v512 = vld [vmem:[%s0 + $0xa8] sm:$0xff]
          %v513 = vld [vmem:[%s0 + $0xb0] sm:$0xff]
          %v514 = vld [vmem:[%s0 + $0xb8] sm:$0xff]
          %v515 = vld [vmem:[%s0 + $0xc0] sm:$0xff]
          %v516 = vld [vmem:[%s0 + $0xc8] sm:$0xff]
          %v517 = vld [vmem:[%s0 + $0xd0] sm:$0xff]
          %v518 = vld [vmem:[%s0 + $0xd8] sm:$0xff]
          %v519 = vld [vmem:[%s0 + $0xe0] sm:$0xff]
          %v520 = vld [vmem:[%s0 + $0xe8] sm:$0xff]
          %v521 = vld [vmem:[%s0 + $0xf0] sm:$0xff]
          %v522 = vld [vmem:[%s0 + $0xf8] sm:$0xff]
          %v523 = vld [vmem:[%s198] sm:$0xff]
          %v524 = vld [vmem:[%s198 + $0x8] sm:$0xff]
          %v525 = vld [vmem:[%s198 + $0x10] sm:$0xff]
          %v526 = vld [vmem:[%s198 + $0x18] sm:$0xff]
          %v527 = vld [vmem:[%s198 + $0x20] sm:$0xff]
          %v528 = vld [vmem:[%s198 + $0x28] sm:$0xff]
          %v529 = vld [vmem:[%s198 + $0x30] sm:$0xff]
          %v530 = vld [vmem:[%s198 + $0x38] sm:$0xff]
          %v531 = vld [vmem:[%s198 + $0x40] sm:$0xff]
          %v532 = vld [vmem:[%s198 + $0x48] sm:$0xff]
          %v533 = vld [vmem:[%s198 + $0x50] sm:$0xff]
          %v534 = vld [vmem:[%s198 + $0x58] sm:$0xff]
          %v535 = vld [vmem:[%s198 + $0x60] sm:$0xff]
          %v536 = vld [vmem:[%s198 + $0x68] sm:$0xff]
          %v537 = vld [vmem:[%s198 + $0x70] sm:$0xff]
          %v538 = vld [vmem:[%s198 + $0x78] sm:$0xff]
          %v539 = vld [vmem:[%s198 + $0x80] sm:$0xff]
          %v540 = vld [vmem:[%s198 + $0x88] sm:$0xff]
          %v541 = vld [vmem:[%s198 + $0x90] sm:$0xff]
          %v542 = vld [vmem:[%s198 + $0x98] sm:$0xff]
          %v543 = vld [vmem:[%s198 + $0xa0] sm:$0xff]
          %v544 = vld [vmem:[%s198 + $0xa8] sm:$0xff]
          %v545 = vld [vmem:[%s198 + $0xb0] sm:$0xff]
          %v546 = vld [vmem:[%s198 + $0xb8] sm:$0xff]
          %v547 = vld [vmem:[%s198 + $0xc0] sm:$0xff]
          %v548 = vld [vmem:[%s198 + $0xc8] sm:$0xff]
          %v549 = vld [vmem:[%s198 + $0xd0] sm:$0xff]
          %v550 = vld [vmem:[%s198 + $0xd8] sm:$0xff]
          %v551 = vld [vmem:[%s198 + $0xe0] sm:$0xff]
          %v552 = vld [vmem:[%s198 + $0xe8] sm:$0xff]
          %v553 = vld [vmem:[%s198 + $0xf0] sm:$0xff]
          %v554 = vld [vmem:[%s198 + $0xf8] sm:$0xff]
          %555 = vmatprep.subr.mxu0 0.0
          %556 = vmatpush1.msra.mxu0 %v491
          %557 = vmatprep.subr.mxu0 0.0
          %558 = vmatpush1.msra.mxu0 %v492
          %559 = vmatprep.subr.mxu0 0.0
          %560 = vmatpush1.msra.mxu0 %v493
          %561 = vmatprep.subr.mxu0 0.0
          %562 = vmatpush1.msra.mxu0 %v494
          %563 = vmatprep.subr.mxu0 0.0
          %564 = vmatpush1.msra.mxu0 %v495
          %565 = vmatprep.subr.mxu0 0.0
          %566 = vmatpush1.msra.mxu0 %v496
          %567 = vmatprep.subr.mxu0 0.0
          %568 = vmatpush1.msra.mxu0 %v497
          %569 = vmatprep.subr.mxu0 0.0
          %570 = vmatpush1.msra.mxu0 %v498
          %571 = vmatprep.subr.mxu0 0.0
          %572 = vmatpush1.msra.mxu0 %v499
          %573 = vmatprep.subr.mxu0 0.0
          %574 = vmatpush1.msra.mxu0 %v500
          %575 = vmatprep.subr.mxu0 0.0
          %576 = vmatpush1.msra.mxu0 %v501
          %577 = vmatprep.subr.mxu0 0.0
          %578 = vmatpush1.msra.mxu0 %v502
          %579 = vmatprep.subr.mxu0 0.0
          %580 = vmatpush1.msra.mxu0 %v503
          %581 = vmatprep.subr.mxu0 0.0
          %582 = vmatpush1.msra.mxu0 %v504
          %583 = vmatprep.subr.mxu0 0.0
          %584 = vmatpush1.msra.mxu0 %v505
          %585 = vmatprep.subr.mxu0 0.0
          %586 = vmatpush1.msra.mxu0 %v506
          %587 = vmatprep.subr.mxu0 0.0
          %588 = vmatpush1.msra.mxu0 %v507
          %589 = vmatprep.subr.mxu0 0.0
          %590 = vmatpush1.msra.mxu0 %v508
          %591 = vmatprep.subr.mxu0 0.0
          %592 = vmatpush1.msra.mxu0 %v509
          %593 = vmatprep.subr.mxu0 0.0
          %594 = vmatpush1.msra.mxu0 %v510
          %595 = vmatprep.subr.mxu0 0.0
          %596 = vmatpush1.msra.mxu0 %v511
          %597 = vmatprep.subr.mxu0 0.0
          %598 = vmatpush1.msra.mxu0 %v512
          %599 = vmatprep.subr.mxu0 0.0
          %600 = vmatpush1.msra.mxu0 %v513
          %601 = vmatprep.subr.mxu0 0.0
          %602 = vmatpush1.msra.mxu0 %v514
          %603 = vmatprep.subr.mxu0 0.0
          %604 = vmatpush1.msra.mxu0 %v515
          %605 = vmatprep.subr.mxu0 0.0
          %606 = vmatpush1.msra.mxu0 %v516
          %607 = vmatprep.subr.mxu0 0.0
          %608 = vmatpush1.msra.mxu0 %v517
          %609 = vmatprep.subr.mxu0 0.0
          %610 = vmatpush1.msra.mxu0 %v518
          %611 = vmatprep.subr.mxu0 0.0
          %612 = vmatpush1.msra.mxu0 %v519
          %613 = vmatprep.subr.mxu0 0.0
          %614 = vmatpush1.msra.mxu0 %v520
          %615 = vmatprep.subr.mxu0 0.0
          %616 = vmatpush1.msra.mxu0 %v521
          %617 = vmatprep.subr.mxu0 0.0
          %618 = vmatpush1.msra.mxu0 %v522
          %619 = vmatprep.mubr.f32.mxu0 %v524
          %620 = vmatmul.mubr.f32.gmra.mrb[0].mxu0 %v523
          %v621 = vpop.f32.mrb[0].mxu0
          %v622 = vadd.f32 0.0, %v621
          %v623 = vpop.f32.mrb[0].mxu0
          %624 = vmatprep.mubr.f32.mxu0 %v526
          %625 = vmatmul.mubr.f32.gmra.mrb[0].mxu0 %v525
          %v626 = vpop.f32.mrb[0].mxu0
          %v627 = vadd.f32 0.0, %v626
          %v628 = vpop.f32.mrb[0].mxu0
          %629 = vmatprep.mubr.f32.mxu0 %v528
          %630 = vmatmul.mubr.f32.gmra.mrb[0].mxu0 %v527
          %v631 = vpop.f32.mrb[0].mxu0
          %v632 = vadd.f32 0.0, %v631
          %v633 = vpop.f32.mrb[0].mxu0
          %634 = vmatprep.mubr.f32.mxu0 %v530
          %635 = vmatmul.mubr.f32.gmra.mrb[0].mxu0 %v529
          %v636 = vpop.f32.mrb[0].mxu0
          %v637 = vadd.f32 0.0, %v636
          %v638 = vpop.f32.mrb[0].mxu0
          %639 = vmatprep.mubr.f32.mxu0 %v532
          %640 = vmatmul.mubr.f32.gmra.mrb[0].mxu0 %v531
          %v641 = vpop.f32.mrb[0].mxu0
          %v642 = vadd.f32 0.0, %v641
          %v643 = vpop.f32.mrb[0].mxu0
          %644 = vmatprep.mubr.f32.mxu0 %v534
          %645 = vmatmul.mubr.f32.gmra.mrb[0].mxu0 %v533
          %v646 = vpop.f32.mrb[0].mxu0
          %v647 = vadd.f32 0.0, %v646
          %v648 = vpop.f32.mrb[0].mxu0
          %649 = vmatprep.mubr.f32.mxu0 %v536
          %650 = vmatmul.mubr.f32.gmra.mrb[0].mxu0 %v535
          %v651 = vpop.f32.mrb[0].mxu0
          %v652 = vadd.f32 0.0, %v651
          %v653 = vpop.f32.mrb[0].mxu0
          %654 = vmatprep.mubr.f32.mxu0 %v538
          %655 = vmatmul.mubr.f32.gmra.mrb[0].mxu0 %v537
          %v656 = vpop.f32.mrb[0].mxu0
          %v657 = vadd.f32 0.0, %v656
          %v658 = vpop.f32.mrb[0].mxu0
          %659 = vmatprep.mubr.f32.mxu0 %v540
          %660 = vmatmul.mubr.f32.gmra.mrb[0].mxu0 %v539
          %v661 = vpop.f32.mrb[0].mxu0
          %v662 = vadd.f32 0.0, %v661
          %v663 = vpop.f32.mrb[0].mxu0
          %664 = vmatprep.mubr.f32.mxu0 %v542
          %665 = vmatmul.mubr.f32.gmra.mrb[0].mxu0 %v541
          %v666 = vpop.f32.mrb[0].mxu0
          %v667 = vadd.f32 0.0, %v666
          %v668 = vpop.f32.mrb[0].mxu0
          %669 = vmatprep.mubr.f32.mxu0 %v544
          %670 = vmatmul.mubr.f32.gmra.mrb[0].mxu0 %v543
          %v671 = vpop.f32.mrb[0].mxu0
          %v672 = vadd.f32 0.0, %v671
          %v673 = vpop.f32.mrb[0].mxu0
          %674 = vmatprep.mubr.f32.mxu0 %v546
          %675 = vmatmul.mubr.f32.gmra.mrb[0].mxu0 %v545
          %v676 = vpop.f32.mrb[0].mxu0
          %v677 = vadd.f32 0.0, %v676
          %v678 = vpop.f32.mrb[0].mxu0
          %679 = vmatprep.mubr.f32.mxu0 %v548
          %680 = vmatmul.mubr.f32.gmra.mrb[0].mxu0 %v547
          %v681 = vpop.f32.mrb[0].mxu0
          %v682 = vadd.f32 0.0, %v681
          %v683 = vpop.f32.mrb[0].mxu0
          %684 = vmatprep.mubr.f32.mxu0 %v550
          %685 = vmatmul.mubr.f32.gmra.mrb[0].mxu0 %v549
          %v686 = vpop.f32.mrb[0].mxu0
          %v687 = vadd.f32 0.0, %v686
          %v688 = vpop.f32.mrb[0].mxu0
          %689 = vmatprep.mubr.f32.mxu0 %v552
          %690 = vmatmul.mubr.f32.gmra.mrb[0].mxu0 %v551
          %v691 = vpop.f32.mrb[0].mxu0
          %v692 = vadd.f32 0.0, %v691
          %v693 = vpop.f32.mrb[0].mxu0
          %694 = vmatprep.mubr.f32.mxu0 %v554
          %695 = vmatmul.mubr.f32.gmra.mrb[0].mxu0 %v553
          %v696 = vpop.f32.mrb[0].mxu0
          %v697 = vadd.f32 0.0, %v696
          %v698 = vpop.f32.mrb[0].mxu0
          %699 = vdwg.mxu0
          %s700 = sadd.s32 %s236, 256
          %s701 = scalar_lea.vmem [#allocation2], %s700
          %vm702 = vcmask 130048
          %703 = vst.msk [vmem:[%s701] sm:$0xff] %vm702, %v622
          %704 = vst.msk [vmem:[%s701 + $0x8] sm:$0xff] %vm702, %v627
          %705 = vst.msk [vmem:[%s701 + $0x10] sm:$0xff] %vm702, %v632
          %706 = vst.msk [vmem:[%s701 + $0x18] sm:$0xff] %vm702, %v637
          %707 = vst.msk [vmem:[%s701 + $0x20] sm:$0xff] %vm702, %v642
          %708 = vst.msk [vmem:[%s701 + $0x28] sm:$0xff] %vm702, %v647
          %709 = vst.msk [vmem:[%s701 + $0x30] sm:$0xff] %vm702, %v652
          %710 = vst.msk [vmem:[%s701 + $0x38] sm:$0xff] %vm702, %v657
          %711 = vst.msk [vmem:[%s701 + $0x40] sm:$0xff] %vm702, %v662
          %712 = vst.msk [vmem:[%s701 + $0x48] sm:$0xff] %vm702, %v667
          %713 = vst.msk [vmem:[%s701 + $0x50] sm:$0xff] %vm702, %v672
          %714 = vst.msk [vmem:[%s701 + $0x58] sm:$0xff] %vm702, %v677
          %715 = vst.msk [vmem:[%s701 + $0x60] sm:$0xff] %vm702, %v682
          %716 = vst.msk [vmem:[%s701 + $0x68] sm:$0xff] %vm702, %v687
          %717 = vst.msk [vmem:[%s701 + $0x70] sm:$0xff] %vm702, %v692
          %718 = vst.msk [vmem:[%s701 + $0x78] sm:$0xff] %vm702, %v697
          %s719 = scalar_lea.vmem [#allocation3], %s236
          %v720 = vld [vmem:[%s719] sm:$0xff]
          %v721 = vld [vmem:[%s719 + $0x8] sm:$0xff]
          %v722 = vld [vmem:[%s719 + $0x10] sm:$0xff]
          %v723 = vld [vmem:[%s719 + $0x18] sm:$0xff]
          %v724 = vld [vmem:[%s719 + $0x20] sm:$0xff]
          %v725 = vld [vmem:[%s719 + $0x28] sm:$0xff]
          %v726 = vld [vmem:[%s719 + $0x30] sm:$0xff]
          %v727 = vld [vmem:[%s719 + $0x38] sm:$0xff]
          %v728 = vld [vmem:[%s719 + $0x40] sm:$0xff]
          %v729 = vld [vmem:[%s719 + $0x48] sm:$0xff]
          %v730 = vld [vmem:[%s719 + $0x50] sm:$0xff]
          %v731 = vld [vmem:[%s719 + $0x58] sm:$0xff]
          %v732 = vld [vmem:[%s719 + $0x60] sm:$0xff]
          %v733 = vld [vmem:[%s719 + $0x68] sm:$0xff]
          %v734 = vld [vmem:[%s719 + $0x70] sm:$0xff]
          %v735 = vld [vmem:[%s719 + $0x78] sm:$0xff]
          %v736 = vld [vmem:[%s234] sm:$0xff]
          %v737 = vld [vmem:[%s234 + $0x8] sm:$0xff]
          %v739 = vsel %vm702, %v622, 0
          %v742 = vsel %vm702, %v627, 0
          %v745 = vsel %vm702, %v632, 0
          %v748 = vsel %vm702, %v637, 0
          %v751 = vsel %vm702, %v642, 0
          %v754 = vsel %vm702, %v647, 0
          %v757 = vsel %vm702, %v652, 0
          %v760 = vsel %vm702, %v657, 0
          %v763 = vsel %vm702, %v662, 0
          %v766 = vsel %vm702, %v667, 0
          %v769 = vsel %vm702, %v672, 0
          %v772 = vsel %vm702, %v677, 0
          %v775 = vsel %vm702, %v682, 0
          %v778 = vsel %vm702, %v687, 0
          %v781 = vsel %vm702, %v692, 0
          %v784 = vsel %vm702, %v697, 0
          %786 = vmatprep.subr.mxu0 0.0
          %787 = vmatpush1.msra.mxu0 %v736
          %788 = vmatprep.subr.mxu0 0.0
          %789 = vmatpush1.msra.mxu0 %v737
          %790 = vmatprep.subr.mxu0 0.0
          %791 = vmatpush1.msra.mxu0 0.0
          %792 = vmatprep.subr.mxu0 0.0
          %793 = vmatpush1.msra.mxu0 0.0
          %794 = vmatprep.subr.mxu0 0.0
          %795 = vmatpush1.msra.mxu0 0.0
          %796 = vmatprep.subr.mxu0 0.0
          %797 = vmatpush1.msra.mxu0 0.0
          %798 = vmatprep.subr.mxu0 0.0
          %799 = vmatpush1.msra.mxu0 0.0
          %800 = vmatprep.subr.mxu0 0.0
          %801 = vmatpush1.msra.mxu0 0.0
          %802 = vmatprep.subr.mxu0 0.0
          %803 = vmatpush1.msra.mxu0 0.0
          %804 = vmatprep.subr.mxu0 0.0
          %805 = vmatpush1.msra.mxu0 0.0
          %806 = vmatprep.subr.mxu0 0.0
          %807 = vmatpush1.msra.mxu0 0.0
          %808 = vmatprep.subr.mxu0 0.0
          %809 = vmatpush1.msra.mxu0 0.0
          %810 = vmatprep.subr.mxu0 0.0
          %811 = vmatpush1.msra.mxu0 0.0
          %812 = vmatprep.subr.mxu0 0.0
          %813 = vmatpush1.msra.mxu0 0.0
          %814 = vmatprep.subr.mxu0 0.0
          %815 = vmatpush1.msra.mxu0 0.0
          %816 = vmatprep.subr.mxu0 0.0
          %817 = vmatpush1.msra.mxu0 0.0
          %818 = vmatprep.subr.mxu0 0.0
          %819 = vmatpush1.msra.mxu0 0.0
          %820 = vmatprep.subr.mxu0 0.0
          %821 = vmatpush1.msra.mxu0 0.0
          %822 = vmatprep.subr.mxu0 0.0
          %823 = vmatpush1.msra.mxu0 0.0
          %824 = vmatprep.subr.mxu0 0.0
          %825 = vmatpush1.msra.mxu0 0.0
          %826 = vmatprep.subr.mxu0 0.0
          %827 = vmatpush1.msra.mxu0 0.0
          %828 = vmatprep.subr.mxu0 0.0
          %829 = vmatpush1.msra.mxu0 0.0
          %830 = vmatprep.subr.mxu0 0.0
          %831 = vmatpush1.msra.mxu0 0.0
          %832 = vmatprep.subr.mxu0 0.0
          %833 = vmatpush1.msra.mxu0 0.0
          %834 = vmatprep.subr.mxu0 0.0
          %835 = vmatpush1.msra.mxu0 0.0
          %836 = vmatprep.subr.mxu0 0.0
          %837 = vmatpush1.msra.mxu0 0.0
          %838 = vmatprep.subr.mxu0 0.0
          %839 = vmatpush1.msra.mxu0 0.0
          %840 = vmatprep.subr.mxu0 0.0
          %841 = vmatpush1.msra.mxu0 0.0
          %842 = vmatprep.subr.mxu0 0.0
          %843 = vmatpush1.msra.mxu0 0.0
          %844 = vmatprep.subr.mxu0 0.0
          %845 = vmatpush1.msra.mxu0 0.0
          %846 = vmatprep.subr.mxu0 0.0
          %847 = vmatpush1.msra.mxu0 0.0
          %848 = vmatprep.subr.mxu0 0.0
          %849 = vmatpush1.msra.mxu0 0.0
          %850 = vmatprep.mubr.f32.mxu0 0.0
          %851 = vmatmul.mubr.f32.gmra.mrb[0].mxu0 %v739
          %v852 = vpop.f32.mrb[0].mxu0
          %v853 = vadd.f32 0.0, %v852
          %v854 = vpop.f32.mrb[0].mxu0
          %855 = vmatprep.mubr.f32.mxu0 0.0
          %856 = vmatmul.mubr.f32.gmra.mrb[0].mxu0 %v742
          %v857 = vpop.f32.mrb[0].mxu0
          %v858 = vadd.f32 0.0, %v857
          %v859 = vpop.f32.mrb[0].mxu0
          %860 = vmatprep.mubr.f32.mxu0 0.0
          %861 = vmatmul.mubr.f32.gmra.mrb[0].mxu0 %v745
          %v862 = vpop.f32.mrb[0].mxu0
          %v863 = vadd.f32 0.0, %v862
          %v864 = vpop.f32.mrb[0].mxu0
          %865 = vmatprep.mubr.f32.mxu0 0.0
          %866 = vmatmul.mubr.f32.gmra.mrb[0].mxu0 %v748
          %v867 = vpop.f32.mrb[0].mxu0
          %v868 = vadd.f32 0.0, %v867
          %v869 = vpop.f32.mrb[0].mxu0
          %870 = vmatprep.mubr.f32.mxu0 0.0
          %871 = vmatmul.mubr.f32.gmra.mrb[0].mxu0 %v751
          %v872 = vpop.f32.mrb[0].mxu0
          %v873 = vadd.f32 0.0, %v872
          %v874 = vpop.f32.mrb[0].mxu0
          %875 = vmatprep.mubr.f32.mxu0 0.0
          %876 = vmatmul.mubr.f32.gmra.mrb[0].mxu0 %v754
          %v877 = vpop.f32.mrb[0].mxu0
          %v878 = vadd.f32 0.0, %v877
          %v879 = vpop.f32.mrb[0].mxu0
          %880 = vmatprep.mubr.f32.mxu0 0.0
          %881 = vmatmul.mubr.f32.gmra.mrb[0].mxu0 %v757
          %v882 = vpop.f32.mrb[0].mxu0
          %v883 = vadd.f32 0.0, %v882
          %v884 = vpop.f32.mrb[0].mxu0
          %885 = vmatprep.mubr.f32.mxu0 0.0
          %886 = vmatmul.mubr.f32.gmra.mrb[0].mxu0 %v760
          %v887 = vpop.f32.mrb[0].mxu0
          %v888 = vadd.f32 0.0, %v887
          %v889 = vpop.f32.mrb[0].mxu0
          %890 = vmatprep.mubr.f32.mxu0 0.0
          %891 = vmatmul.mubr.f32.gmra.mrb[0].mxu0 %v763
          %v892 = vpop.f32.mrb[0].mxu0
          %v893 = vadd.f32 0.0, %v892
          %v894 = vpop.f32.mrb[0].mxu0
          %895 = vmatprep.mubr.f32.mxu0 0.0
          %896 = vmatmul.mubr.f32.gmra.mrb[0].mxu0 %v766
          %v897 = vpop.f32.mrb[0].mxu0
          %v898 = vadd.f32 0.0, %v897
          %v899 = vpop.f32.mrb[0].mxu0
          %900 = vmatprep.mubr.f32.mxu0 0.0
          %901 = vmatmul.mubr.f32.gmra.mrb[0].mxu0 %v769
          %v902 = vpop.f32.mrb[0].mxu0
          %v903 = vadd.f32 0.0, %v902
          %v904 = vpop.f32.mrb[0].mxu0
          %905 = vmatprep.mubr.f32.mxu0 0.0
          %906 = vmatmul.mubr.f32.gmra.mrb[0].mxu0 %v772
          %v907 = vpop.f32.mrb[0].mxu0
          %v908 = vadd.f32 0.0, %v907
          %v909 = vpop.f32.mrb[0].mxu0
          %910 = vmatprep.mubr.f32.mxu0 0.0
          %911 = vmatmul.mubr.f32.gmra.mrb[0].mxu0 %v775
          %v912 = vpop.f32.mrb[0].mxu0
          %v913 = vadd.f32 0.0, %v912
          %v914 = vpop.f32.mrb[0].mxu0
          %915 = vmatprep.mubr.f32.mxu0 0.0
          %916 = vmatmul.mubr.f32.gmra.mrb[0].mxu0 %v778
          %v917 = vpop.f32.mrb[0].mxu0
          %v918 = vadd.f32 0.0, %v917
          %v919 = vpop.f32.mrb[0].mxu0
          %920 = vmatprep.mubr.f32.mxu0 0.0
          %921 = vmatmul.mubr.f32.gmra.mrb[0].mxu0 %v781
          %v922 = vpop.f32.mrb[0].mxu0
          %v923 = vadd.f32 0.0, %v922
          %v924 = vpop.f32.mrb[0].mxu0
          %925 = vmatprep.mubr.f32.mxu0 0.0
          %926 = vmatmul.mubr.f32.gmra.mrb[0].mxu0 %v784
          %v927 = vpop.f32.mrb[0].mxu0
          %v928 = vadd.f32 0.0, %v927
          %v929 = vpop.f32.mrb[0].mxu0
          %930 = vdwg.mxu0
          %v931 = vmax.f32 %v853, 0.0
          %v932 = vmax.f32 %v858, 0.0
          %v933 = vmax.f32 %v863, 0.0
          %v934 = vmax.f32 %v868, 0.0
          %v935 = vmax.f32 %v873, 0.0
          %v936 = vmax.f32 %v878, 0.0
          %v937 = vmax.f32 %v883, 0.0
          %v938 = vmax.f32 %v888, 0.0
          %v939 = vmax.f32 %v893, 0.0
          %v940 = vmax.f32 %v898, 0.0
          %v941 = vmax.f32 %v903, 0.0
          %v942 = vmax.f32 %v908, 0.0
          %v943 = vmax.f32 %v913, 0.0
          %v944 = vmax.f32 %v918, 0.0
          %v945 = vmax.f32 %v923, 0.0
          %v946 = vmax.f32 %v928, 0.0
          %v947 = vadd.f32 %v720, %v931
          %v948 = vadd.f32 %v721, %v932
          %v949 = vadd.f32 %v722, %v933
          %v950 = vadd.f32 %v723, %v934
          %v951 = vadd.f32 %v724, %v935
          %v952 = vadd.f32 %v725, %v936
          %v953 = vadd.f32 %v726, %v937
          %v954 = vadd.f32 %v727, %v938
          %v955 = vadd.f32 %v728, %v939
          %v956 = vadd.f32 %v729, %v940
          %v957 = vadd.f32 %v730, %v941
          %v958 = vadd.f32 %v731, %v942
          %v959 = vadd.f32 %v732, %v943
          %v960 = vadd.f32 %v733, %v944
          %v961 = vadd.f32 %v734, %v945
          %v962 = vadd.f32 %v735, %v946
          %963 = vst [vmem:[%s719] sm:$0xff] %v947
          %964 = vst [vmem:[%s719 + $0x8] sm:$0xff] %v948
          %965 = vst [vmem:[%s719 + $0x10] sm:$0xff] %v949
          %966 = vst [vmem:[%s719 + $0x18] sm:$0xff] %v950
          %967 = vst [vmem:[%s719 + $0x20] sm:$0xff] %v951
          %968 = vst [vmem:[%s719 + $0x28] sm:$0xff] %v952
          %969 = vst [vmem:[%s719 + $0x30] sm:$0xff] %v953
          %970 = vst [vmem:[%s719 + $0x38] sm:$0xff] %v954
          %971 = vst [vmem:[%s719 + $0x40] sm:$0xff] %v955
          %972 = vst [vmem:[%s719 + $0x48] sm:$0xff] %v956
          %973 = vst [vmem:[%s719 + $0x50] sm:$0xff] %v957
          %974 = vst [vmem:[%s719 + $0x58] sm:$0xff] %v958
          %975 = vst [vmem:[%s719 + $0x60] sm:$0xff] %v959
          %976 = vst [vmem:[%s719 + $0x68] sm:$0xff] %v960
          %977 = vst [vmem:[%s719 + $0x70] sm:$0xff] %v961
          %978 = vst [vmem:[%s719 + $0x78] sm:$0xff] %v962
        $region44: #{tpu_custom_call.1} parent=31 // pred_fallthru
          _
        %p979 = scmp.ge.s32.totalorder %s24, 2
        %p980 = scmp.lt.s32.totalorder %s24, 0
        %s981 = ssub.s32 0, %s24
        %s982 = scalar_select %p980, %s981, %s24
        %s983 = sand.u32 %s982, 1
        %s984 = ssub.s32 0, %s983
        %s985 = scalar_select %p980, %s984, %s983
        %p986 = scmp.ne.s32.totalorder %s985, 0
        %p987 = scmp.lt.s32.totalorder %s985, 0
        %p988 = pnand %p987, %p986
        %p989 = pneg %p988
        %s990 = sadd.s32 %s985, 2
        %s991 = scalar_select %p989, %s990, %s985
        %p992 = scmp.eq.s32.totalorder %s991, 0
        %p993 = pnand %p979, %p992
        %p994 = pneg %p993
        // Predicated region
        $region45: #{tpu_custom_call.1} parent=31 // pred_check
          _
        $region46: #{tpu_custom_call.1} parent=31 // pred_check_branch
          %996 = sbr.rel (%p993) target = $region48
        $region47: #{tpu_custom_call.1} parent=31 // pred_region
          %s997 = scalar_lea.vmem [#allocation2], 256
          %v998 = vld [vmem:[%s997] sm:$0xff]
          %v999 = vld [vmem:[%s997 + $0x8] sm:$0xff]
          %v1000 = vld [vmem:[%s997 + $0x10] sm:$0xff]
          %v1001 = vld [vmem:[%s997 + $0x18] sm:$0xff]
          %v1002 = vld [vmem:[%s997 + $0x20] sm:$0xff]
          %v1003 = vld [vmem:[%s997 + $0x28] sm:$0xff]
          %v1004 = vld [vmem:[%s997 + $0x30] sm:$0xff]
          %v1005 = vld [vmem:[%s997 + $0x38] sm:$0xff]
          %v1006 = vld [vmem:[%s997 + $0x40] sm:$0xff]
          %v1007 = vld [vmem:[%s997 + $0x48] sm:$0xff]
          %v1008 = vld [vmem:[%s997 + $0x50] sm:$0xff]
          %v1009 = vld [vmem:[%s997 + $0x58] sm:$0xff]
          %v1010 = vld [vmem:[%s997 + $0x60] sm:$0xff]
          %v1011 = vld [vmem:[%s997 + $0x68] sm:$0xff]
          %v1012 = vld [vmem:[%s997 + $0x70] sm:$0xff]
          %v1013 = vld [vmem:[%s997 + $0x78] sm:$0xff]
          %v1014 = vld [vmem:[%s997 + $0x80] sm:$0xff]
          %v1015 = vld [vmem:[%s997 + $0x88] sm:$0xff]
          %v1016 = vld [vmem:[%s997 + $0x90] sm:$0xff]
          %v1017 = vld [vmem:[%s997 + $0x98] sm:$0xff]
          %v1018 = vld [vmem:[%s997 + $0xa0] sm:$0xff]
          %v1019 = vld [vmem:[%s997 + $0xa8] sm:$0xff]
          %v1020 = vld [vmem:[%s997 + $0xb0] sm:$0xff]
          %v1021 = vld [vmem:[%s997 + $0xb8] sm:$0xff]
          %v1022 = vld [vmem:[%s997 + $0xc0] sm:$0xff]
          %v1023 = vld [vmem:[%s997 + $0xc8] sm:$0xff]
          %v1024 = vld [vmem:[%s997 + $0xd0] sm:$0xff]
          %v1025 = vld [vmem:[%s997 + $0xd8] sm:$0xff]
          %v1026 = vld [vmem:[%s997 + $0xe0] sm:$0xff]
          %v1027 = vld [vmem:[%s997 + $0xe8] sm:$0xff]
          %v1028 = vld [vmem:[%s997 + $0xf0] sm:$0xff]
          %v1029 = vld [vmem:[%s997 + $0xf8] sm:$0xff]
          %v1030 = vld [vmem:[%s198] sm:$0xff]
          %v1031 = vld [vmem:[%s198 + $0x8] sm:$0xff]
          %v1032 = vld [vmem:[%s198 + $0x10] sm:$0xff]
          %v1033 = vld [vmem:[%s198 + $0x18] sm:$0xff]
          %v1034 = vld [vmem:[%s198 + $0x20] sm:$0xff]
          %v1035 = vld [vmem:[%s198 + $0x28] sm:$0xff]
          %v1036 = vld [vmem:[%s198 + $0x30] sm:$0xff]
          %v1037 = vld [vmem:[%s198 + $0x38] sm:$0xff]
          %v1038 = vld [vmem:[%s198 + $0x40] sm:$0xff]
          %v1039 = vld [vmem:[%s198 + $0x48] sm:$0xff]
          %v1040 = vld [vmem:[%s198 + $0x50] sm:$0xff]
          %v1041 = vld [vmem:[%s198 + $0x58] sm:$0xff]
          %v1042 = vld [vmem:[%s198 + $0x60] sm:$0xff]
          %v1043 = vld [vmem:[%s198 + $0x68] sm:$0xff]
          %v1044 = vld [vmem:[%s198 + $0x70] sm:$0xff]
          %v1045 = vld [vmem:[%s198 + $0x78] sm:$0xff]
          %v1046 = vld [vmem:[%s198 + $0x80] sm:$0xff]
          %v1047 = vld [vmem:[%s198 + $0x88] sm:$0xff]
          %v1048 = vld [vmem:[%s198 + $0x90] sm:$0xff]
          %v1049 = vld [vmem:[%s198 + $0x98] sm:$0xff]
          %v1050 = vld [vmem:[%s198 + $0xa0] sm:$0xff]
          %v1051 = vld [vmem:[%s198 + $0xa8] sm:$0xff]
          %v1052 = vld [vmem:[%s198 + $0xb0] sm:$0xff]
          %v1053 = vld [vmem:[%s198 + $0xb8] sm:$0xff]
          %v1054 = vld [vmem:[%s198 + $0xc0] sm:$0xff]
          %v1055 = vld [vmem:[%s198 + $0xc8] sm:$0xff]
          %v1056 = vld [vmem:[%s198 + $0xd0] sm:$0xff]
          %v1057 = vld [vmem:[%s198 + $0xd8] sm:$0xff]
          %v1058 = vld [vmem:[%s198 + $0xe0] sm:$0xff]
          %v1059 = vld [vmem:[%s198 + $0xe8] sm:$0xff]
          %v1060 = vld [vmem:[%s198 + $0xf0] sm:$0xff]
          %v1061 = vld [vmem:[%s198 + $0xf8] sm:$0xff]
          %1062 = vmatprep.subr.mxu0 0.0
          %1063 = vmatpush1.msra.mxu0 %v998
          %1064 = vmatprep.subr.mxu0 0.0
          %1065 = vmatpush1.msra.mxu0 %v999
          %1066 = vmatprep.subr.mxu0 0.0
          %1067 = vmatpush1.msra.mxu0 %v1000
          %1068 = vmatprep.subr.mxu0 0.0
          %1069 = vmatpush1.msra.mxu0 %v1001
          %1070 = vmatprep.subr.mxu0 0.0
          %1071 = vmatpush1.msra.mxu0 %v1002
          %1072 = vmatprep.subr.mxu0 0.0
          %1073 = vmatpush1.msra.mxu0 %v1003
          %1074 = vmatprep.subr.mxu0 0.0
          %1075 = vmatpush1.msra.mxu0 %v1004
          %1076 = vmatprep.subr.mxu0 0.0
          %1077 = vmatpush1.msra.mxu0 %v1005
          %1078 = vmatprep.subr.mxu0 0.0
          %1079 = vmatpush1.msra.mxu0 %v1006
          %1080 = vmatprep.subr.mxu0 0.0
          %1081 = vmatpush1.msra.mxu0 %v1007
          %1082 = vmatprep.subr.mxu0 0.0
          %1083 = vmatpush1.msra.mxu0 %v1008
          %1084 = vmatprep.subr.mxu0 0.0
          %1085 = vmatpush1.msra.mxu0 %v1009
          %1086 = vmatprep.subr.mxu0 0.0
          %1087 = vmatpush1.msra.mxu0 %v1010
          %1088 = vmatprep.subr.mxu0 0.0
          %1089 = vmatpush1.msra.mxu0 %v1011
          %1090 = vmatprep.subr.mxu0 0.0
          %1091 = vmatpush1.msra.mxu0 %v1012
          %1092 = vmatprep.subr.mxu0 0.0
          %1093 = vmatpush1.msra.mxu0 %v1013
          %1094 = vmatprep.subr.mxu0 0.0
          %1095 = vmatpush1.msra.mxu0 %v1014
          %1096 = vmatprep.subr.mxu0 0.0
          %1097 = vmatpush1.msra.mxu0 %v1015
          %1098 = vmatprep.subr.mxu0 0.0
          %1099 = vmatpush1.msra.mxu0 %v1016
          %1100 = vmatprep.subr.mxu0 0.0
          %1101 = vmatpush1.msra.mxu0 %v1017
          %1102 = vmatprep.subr.mxu0 0.0
          %1103 = vmatpush1.msra.mxu0 %v1018
          %1104 = vmatprep.subr.mxu0 0.0
          %1105 = vmatpush1.msra.mxu0 %v1019
          %1106 = vmatprep.subr.mxu0 0.0
          %1107 = vmatpush1.msra.mxu0 %v1020
          %1108 = vmatprep.subr.mxu0 0.0
          %1109 = vmatpush1.msra.mxu0 %v1021
          %1110 = vmatprep.subr.mxu0 0.0
          %1111 = vmatpush1.msra.mxu0 %v1022
          %1112 = vmatprep.subr.mxu0 0.0
          %1113 = vmatpush1.msra.mxu0 %v1023
          %1114 = vmatprep.subr.mxu0 0.0
          %1115 = vmatpush1.msra.mxu0 %v1024
          %1116 = vmatprep.subr.mxu0 0.0
          %1117 = vmatpush1.msra.mxu0 %v1025
          %1118 = vmatprep.subr.mxu0 0.0
          %1119 = vmatpush1.msra.mxu0 %v1026
          %1120 = vmatprep.subr.mxu0 0.0
          %1121 = vmatpush1.msra.mxu0 %v1027
          %1122 = vmatprep.subr.mxu0 0.0
          %1123 = vmatpush1.msra.mxu0 %v1028
          %1124 = vmatprep.subr.mxu0 0.0
          %1125 = vmatpush1.msra.mxu0 %v1029
          %1126 = vmatprep.mubr.f32.mxu0 %v1031
          %1127 = vmatmul.mubr.f32.gmra.mrb[0].mxu0 %v1030
          %v1128 = vpop.f32.mrb[0].mxu0
          %v1129 = vadd.f32 0.0, %v1128
          %v1130 = vpop.f32.mrb[0].mxu0
          %1131 = vmatprep.mubr.f32.mxu0 %v1033
          %1132 = vmatmul.mubr.f32.gmra.mrb[0].mxu0 %v1032
          %v1133 = vpop.f32.mrb[0].mxu0
          %v1134 = vadd.f32 0.0, %v1133
          %v1135 = vpop.f32.mrb[0].mxu0
          %1136 = vmatprep.mubr.f32.mxu0 %v1035
          %1137 = vmatmul.mubr.f32.gmra.mrb[0].mxu0 %v1034
          %v1138 = vpop.f32.mrb[0].mxu0
          %v1139 = vadd.f32 0.0, %v1138
          %v1140 = vpop.f32.mrb[0].mxu0
          %1141 = vmatprep.mubr.f32.mxu0 %v1037
          %1142 = vmatmul.mubr.f32.gmra.mrb[0].mxu0 %v1036
          %v1143 = vpop.f32.mrb[0].mxu0
          %v1144 = vadd.f32 0.0, %v1143
          %v1145 = vpop.f32.mrb[0].mxu0
          %1146 = vmatprep.mubr.f32.mxu0 %v1039
          %1147 = vmatmul.mubr.f32.gmra.mrb[0].mxu0 %v1038
          %v1148 = vpop.f32.mrb[0].mxu0
          %v1149 = vadd.f32 0.0, %v1148
          %v1150 = vpop.f32.mrb[0].mxu0
          %1151 = vmatprep.mubr.f32.mxu0 %v1041
          %1152 = vmatmul.mubr.f32.gmra.mrb[0].mxu0 %v1040
          %v1153 = vpop.f32.mrb[0].mxu0
          %v1154 = vadd.f32 0.0, %v1153
          %v1155 = vpop.f32.mrb[0].mxu0
          %1156 = vmatprep.mubr.f32.mxu0 %v1043
          %1157 = vmatmul.mubr.f32.gmra.mrb[0].mxu0 %v1042
          %v1158 = vpop.f32.mrb[0].mxu0
          %v1159 = vadd.f32 0.0, %v1158
          %v1160 = vpop.f32.mrb[0].mxu0
          %1161 = vmatprep.mubr.f32.mxu0 %v1045
          %1162 = vmatmul.mubr.f32.gmra.mrb[0].mxu0 %v1044
          %v1163 = vpop.f32.mrb[0].mxu0
          %v1164 = vadd.f32 0.0, %v1163
          %v1165 = vpop.f32.mrb[0].mxu0
          %1166 = vmatprep.mubr.f32.mxu0 %v1047
          %1167 = vmatmul.mubr.f32.gmra.mrb[0].mxu0 %v1046
          %v1168 = vpop.f32.mrb[0].mxu0
          %v1169 = vadd.f32 0.0, %v1168
          %v1170 = vpop.f32.mrb[0].mxu0
          %1171 = vmatprep.mubr.f32.mxu0 %v1049
          %1172 = vmatmul.mubr.f32.gmra.mrb[0].mxu0 %v1048
          %v1173 = vpop.f32.mrb[0].mxu0
          %v1174 = vadd.f32 0.0, %v1173
          %v1175 = vpop.f32.mrb[0].mxu0
          %1176 = vmatprep.mubr.f32.mxu0 %v1051
          %1177 = vmatmul.mubr.f32.gmra.mrb[0].mxu0 %v1050
          %v1178 = vpop.f32.mrb[0].mxu0
          %v1179 = vadd.f32 0.0, %v1178
          %v1180 = vpop.f32.mrb[0].mxu0
          %1181 = vmatprep.mubr.f32.mxu0 %v1053
          %1182 = vmatmul.mubr.f32.gmra.mrb[0].mxu0 %v1052
          %v1183 = vpop.f32.mrb[0].mxu0
          %v1184 = vadd.f32 0.0, %v1183
          %v1185 = vpop.f32.mrb[0].mxu0
          %1186 = vmatprep.mubr.f32.mxu0 %v1055
          %1187 = vmatmul.mubr.f32.gmra.mrb[0].mxu0 %v1054
          %v1188 = vpop.f32.mrb[0].mxu0
          %v1189 = vadd.f32 0.0, %v1188
          %v1190 = vpop.f32.mrb[0].mxu0
          %1191 = vmatprep.mubr.f32.mxu0 %v1057
          %1192 = vmatmul.mubr.f32.gmra.mrb[0].mxu0 %v1056
          %v1193 = vpop.f32.mrb[0].mxu0
          %v1194 = vadd.f32 0.0, %v1193
          %v1195 = vpop.f32.mrb[0].mxu0
          %1196 = vmatprep.mubr.f32.mxu0 %v1059
          %1197 = vmatmul.mubr.f32.gmra.mrb[0].mxu0 %v1058
          %v1198 = vpop.f32.mrb[0].mxu0
          %v1199 = vadd.f32 0.0, %v1198
          %v1200 = vpop.f32.mrb[0].mxu0
          %1201 = vmatprep.mubr.f32.mxu0 %v1061
          %1202 = vmatmul.mubr.f32.gmra.mrb[0].mxu0 %v1060
          %v1203 = vpop.f32.mrb[0].mxu0
          %v1204 = vadd.f32 0.0, %v1203
          %v1205 = vpop.f32.mrb[0].mxu0
          %1206 = vdwg.mxu0
          %s1207 = scalar_lea.vmem [#allocation2], %s236
          %vm1208 = vcmask 130048
          %1209 = vst.msk [vmem:[%s1207] sm:$0xff] %vm1208, %v1129
          %1210 = vst.msk [vmem:[%s1207 + $0x8] sm:$0xff] %vm1208, %v1134
          %1211 = vst.msk [vmem:[%s1207 + $0x10] sm:$0xff] %vm1208, %v1139
          %1212 = vst.msk [vmem:[%s1207 + $0x18] sm:$0xff] %vm1208, %v1144
          %1213 = vst.msk [vmem:[%s1207 + $0x20] sm:$0xff] %vm1208, %v1149
          %1214 = vst.msk [vmem:[%s1207 + $0x28] sm:$0xff] %vm1208, %v1154
          %1215 = vst.msk [vmem:[%s1207 + $0x30] sm:$0xff] %vm1208, %v1159
          %1216 = vst.msk [vmem:[%s1207 + $0x38] sm:$0xff] %vm1208, %v1164
          %1217 = vst.msk [vmem:[%s1207 + $0x40] sm:$0xff] %vm1208, %v1169
          %1218 = vst.msk [vmem:[%s1207 + $0x48] sm:$0xff] %vm1208, %v1174
          %1219 = vst.msk [vmem:[%s1207 + $0x50] sm:$0xff] %vm1208, %v1179
          %1220 = vst.msk [vmem:[%s1207 + $0x58] sm:$0xff] %vm1208, %v1184
          %1221 = vst.msk [vmem:[%s1207 + $0x60] sm:$0xff] %vm1208, %v1189
          %1222 = vst.msk [vmem:[%s1207 + $0x68] sm:$0xff] %vm1208, %v1194
          %1223 = vst.msk [vmem:[%s1207 + $0x70] sm:$0xff] %vm1208, %v1199
          %1224 = vst.msk [vmem:[%s1207 + $0x78] sm:$0xff] %vm1208, %v1204
          %s1225 = scalar_lea.vmem [#allocation3], %s236
          %v1226 = vld [vmem:[%s1225] sm:$0xff]
          %v1227 = vld [vmem:[%s1225 + $0x8] sm:$0xff]
          %v1228 = vld [vmem:[%s1225 + $0x10] sm:$0xff]
          %v1229 = vld [vmem:[%s1225 + $0x18] sm:$0xff]
          %v1230 = vld [vmem:[%s1225 + $0x20] sm:$0xff]
          %v1231 = vld [vmem:[%s1225 + $0x28] sm:$0xff]
          %v1232 = vld [vmem:[%s1225 + $0x30] sm:$0xff]
          %v1233 = vld [vmem:[%s1225 + $0x38] sm:$0xff]
          %v1234 = vld [vmem:[%s1225 + $0x40] sm:$0xff]
          %v1235 = vld [vmem:[%s1225 + $0x48] sm:$0xff]
          %v1236 = vld [vmem:[%s1225 + $0x50] sm:$0xff]
          %v1237 = vld [vmem:[%s1225 + $0x58] sm:$0xff]
          %v1238 = vld [vmem:[%s1225 + $0x60] sm:$0xff]
          %v1239 = vld [vmem:[%s1225 + $0x68] sm:$0xff]
          %v1240 = vld [vmem:[%s1225 + $0x70] sm:$0xff]
          %v1241 = vld [vmem:[%s1225 + $0x78] sm:$0xff]
          %v1242 = vld [vmem:[%s234] sm:$0xff]
          %v1243 = vld [vmem:[%s234 + $0x8] sm:$0xff]
          %v1245 = vsel %vm1208, %v1129, 0
          %v1248 = vsel %vm1208, %v1134, 0
          %v1251 = vsel %vm1208, %v1139, 0
          %v1254 = vsel %vm1208, %v1144, 0
          %v1257 = vsel %vm1208, %v1149, 0
          %v1260 = vsel %vm1208, %v1154, 0
          %v1263 = vsel %vm1208, %v1159, 0
          %v1266 = vsel %vm1208, %v1164, 0
          %v1269 = vsel %vm1208, %v1169, 0
          %v1272 = vsel %vm1208, %v1174, 0
          %v1275 = vsel %vm1208, %v1179, 0
          %v1278 = vsel %vm1208, %v1184, 0
          %v1281 = vsel %vm1208, %v1189, 0
          %v1284 = vsel %vm1208, %v1194, 0
          %v1287 = vsel %vm1208, %v1199, 0
          %v1290 = vsel %vm1208, %v1204, 0
          %1292 = vmatprep.subr.mxu0 0.0
          %1293 = vmatpush1.msra.mxu0 %v1242
          %1294 = vmatprep.subr.mxu0 0.0
          %1295 = vmatpush1.msra.mxu0 %v1243
          %1296 = vmatprep.subr.mxu0 0.0
          %1297 = vmatpush1.msra.mxu0 0.0
          %1298 = vmatprep.subr.mxu0 0.0
          %1299 = vmatpush1.msra.mxu0 0.0
          %1300 = vmatprep.subr.mxu0 0.0
          %1301 = vmatpush1.msra.mxu0 0.0
          %1302 = vmatprep.subr.mxu0 0.0
          %1303 = vmatpush1.msra.mxu0 0.0
          %1304 = vmatprep.subr.mxu0 0.0
          %1305 = vmatpush1.msra.mxu0 0.0
          %1306 = vmatprep.subr.mxu0 0.0
          %1307 = vmatpush1.msra.mxu0 0.0
          %1308 = vmatprep.subr.mxu0 0.0
          %1309 = vmatpush1.msra.mxu0 0.0
          %1310 = vmatprep.subr.mxu0 0.0
          %1311 = vmatpush1.msra.mxu0 0.0
          %1312 = vmatprep.subr.mxu0 0.0
          %1313 = vmatpush1.msra.mxu0 0.0
          %1314 = vmatprep.subr.mxu0 0.0
          %1315 = vmatpush1.msra.mxu0 0.0
          %1316 = vmatprep.subr.mxu0 0.0
          %1317 = vmatpush1.msra.mxu0 0.0
          %1318 = vmatprep.subr.mxu0 0.0
          %1319 = vmatpush1.msra.mxu0 0.0
          %1320 = vmatprep.subr.mxu0 0.0
          %1321 = vmatpush1.msra.mxu0 0.0
          %1322 = vmatprep.subr.mxu0 0.0
          %1323 = vmatpush1.msra.mxu0 0.0
          %1324 = vmatprep.subr.mxu0 0.0
          %1325 = vmatpush1.msra.mxu0 0.0
          %1326 = vmatprep.subr.mxu0 0.0
          %1327 = vmatpush1.msra.mxu0 0.0
          %1328 = vmatprep.subr.mxu0 0.0
          %1329 = vmatpush1.msra.mxu0 0.0
          %1330 = vmatprep.subr.mxu0 0.0
          %1331 = vmatpush1.msra.mxu0 0.0
          %1332 = vmatprep.subr.mxu0 0.0
          %1333 = vmatpush1.msra.mxu0 0.0
          %1334 = vmatprep.subr.mxu0 0.0
          %1335 = vmatpush1.msra.mxu0 0.0
          %1336 = vmatprep.subr.mxu0 0.0
          %1337 = vmatpush1.msra.mxu0 0.0
          %1338 = vmatprep.subr.mxu0 0.0
          %1339 = vmatpush1.msra.mxu0 0.0
          %1340 = vmatprep.subr.mxu0 0.0
          %1341 = vmatpush1.msra.mxu0 0.0
          %1342 = vmatprep.subr.mxu0 0.0
          %1343 = vmatpush1.msra.mxu0 0.0
          %1344 = vmatprep.subr.mxu0 0.0
          %1345 = vmatpush1.msra.mxu0 0.0
          %1346 = vmatprep.subr.mxu0 0.0
          %1347 = vmatpush1.msra.mxu0 0.0
          %1348 = vmatprep.subr.mxu0 0.0
          %1349 = vmatpush1.msra.mxu0 0.0
          %1350 = vmatprep.subr.mxu0 0.0
          %1351 = vmatpush1.msra.mxu0 0.0
          %1352 = vmatprep.subr.mxu0 0.0
          %1353 = vmatpush1.msra.mxu0 0.0
          %1354 = vmatprep.subr.mxu0 0.0
          %1355 = vmatpush1.msra.mxu0 0.0
          %1356 = vmatprep.mubr.f32.mxu0 0.0
          %1357 = vmatmul.mubr.f32.gmra.mrb[0].mxu0 %v1245
          %v1358 = vpop.f32.mrb[0].mxu0
          %v1359 = vadd.f32 0.0, %v1358
          %v1360 = vpop.f32.mrb[0].mxu0
          %1361 = vmatprep.mubr.f32.mxu0 0.0
          %1362 = vmatmul.mubr.f32.gmra.mrb[0].mxu0 %v1248
          %v1363 = vpop.f32.mrb[0].mxu0
          %v1364 = vadd.f32 0.0, %v1363
          %v1365 = vpop.f32.mrb[0].mxu0
          %1366 = vmatprep.mubr.f32.mxu0 0.0
          %1367 = vmatmul.mubr.f32.gmra.mrb[0].mxu0 %v1251
          %v1368 = vpop.f32.mrb[0].mxu0
          %v1369 = vadd.f32 0.0, %v1368
          %v1370 = vpop.f32.mrb[0].mxu0
          %1371 = vmatprep.mubr.f32.mxu0 0.0
          %1372 = vmatmul.mubr.f32.gmra.mrb[0].mxu0 %v1254
          %v1373 = vpop.f32.mrb[0].mxu0
          %v1374 = vadd.f32 0.0, %v1373
          %v1375 = vpop.f32.mrb[0].mxu0
          %1376 = vmatprep.mubr.f32.mxu0 0.0
          %1377 = vmatmul.mubr.f32.gmra.mrb[0].mxu0 %v1257
          %v1378 = vpop.f32.mrb[0].mxu0
          %v1379 = vadd.f32 0.0, %v1378
          %v1380 = vpop.f32.mrb[0].mxu0
          %1381 = vmatprep.mubr.f32.mxu0 0.0
          %1382 = vmatmul.mubr.f32.gmra.mrb[0].mxu0 %v1260
          %v1383 = vpop.f32.mrb[0].mxu0
          %v1384 = vadd.f32 0.0, %v1383
          %v1385 = vpop.f32.mrb[0].mxu0
          %1386 = vmatprep.mubr.f32.mxu0 0.0
          %1387 = vmatmul.mubr.f32.gmra.mrb[0].mxu0 %v1263
          %v1388 = vpop.f32.mrb[0].mxu0
          %v1389 = vadd.f32 0.0, %v1388
          %v1390 = vpop.f32.mrb[0].mxu0
          %1391 = vmatprep.mubr.f32.mxu0 0.0
          %1392 = vmatmul.mubr.f32.gmra.mrb[0].mxu0 %v1266
          %v1393 = vpop.f32.mrb[0].mxu0
          %v1394 = vadd.f32 0.0, %v1393
          %v1395 = vpop.f32.mrb[0].mxu0
          %1396 = vmatprep.mubr.f32.mxu0 0.0
          %1397 = vmatmul.mubr.f32.gmra.mrb[0].mxu0 %v1269
          %v1398 = vpop.f32.mrb[0].mxu0
          %v1399 = vadd.f32 0.0, %v1398
          %v1400 = vpop.f32.mrb[0].mxu0
          %1401 = vmatprep.mubr.f32.mxu0 0.0
          %1402 = vmatmul.mubr.f32.gmra.mrb[0].mxu0 %v1272
          %v1403 = vpop.f32.mrb[0].mxu0
          %v1404 = vadd.f32 0.0, %v1403
          %v1405 = vpop.f32.mrb[0].mxu0
          %1406 = vmatprep.mubr.f32.mxu0 0.0
          %1407 = vmatmul.mubr.f32.gmra.mrb[0].mxu0 %v1275
          %v1408 = vpop.f32.mrb[0].mxu0
          %v1409 = vadd.f32 0.0, %v1408
          %v1410 = vpop.f32.mrb[0].mxu0
          %1411 = vmatprep.mubr.f32.mxu0 0.0
          %1412 = vmatmul.mubr.f32.gmra.mrb[0].mxu0 %v1278
          %v1413 = vpop.f32.mrb[0].mxu0
          %v1414 = vadd.f32 0.0, %v1413
          %v1415 = vpop.f32.mrb[0].mxu0
          %1416 = vmatprep.mubr.f32.mxu0 0.0
          %1417 = vmatmul.mubr.f32.gmra.mrb[0].mxu0 %v1281
          %v1418 = vpop.f32.mrb[0].mxu0
          %v1419 = vadd.f32 0.0, %v1418
          %v1420 = vpop.f32.mrb[0].mxu0
          %1421 = vmatprep.mubr.f32.mxu0 0.0
          %1422 = vmatmul.mubr.f32.gmra.mrb[0].mxu0 %v1284
          %v1423 = vpop.f32.mrb[0].mxu0
          %v1424 = vadd.f32 0.0, %v1423
          %v1425 = vpop.f32.mrb[0].mxu0
          %1426 = vmatprep.mubr.f32.mxu0 0.0
          %1427 = vmatmul.mubr.f32.gmra.mrb[0].mxu0 %v1287
          %v1428 = vpop.f32.mrb[0].mxu0
          %v1429 = vadd.f32 0.0, %v1428
          %v1430 = vpop.f32.mrb[0].mxu0
          %1431 = vmatprep.mubr.f32.mxu0 0.0
          %1432 = vmatmul.mubr.f32.gmra.mrb[0].mxu0 %v1290
          %v1433 = vpop.f32.mrb[0].mxu0
          %v1434 = vadd.f32 0.0, %v1433
          %v1435 = vpop.f32.mrb[0].mxu0
          %1436 = vdwg.mxu0
          %v1437 = vmax.f32 %v1359, 0.0
          %v1438 = vmax.f32 %v1364, 0.0
          %v1439 = vmax.f32 %v1369, 0.0
          %v1440 = vmax.f32 %v1374, 0.0
          %v1441 = vmax.f32 %v1379, 0.0
          %v1442 = vmax.f32 %v1384, 0.0
          %v1443 = vmax.f32 %v1389, 0.0
          %v1444 = vmax.f32 %v1394, 0.0
          %v1445 = vmax.f32 %v1399, 0.0
          %v1446 = vmax.f32 %v1404, 0.0
          %v1447 = vmax.f32 %v1409, 0.0
          %v1448 = vmax.f32 %v1414, 0.0
          %v1449 = vmax.f32 %v1419, 0.0
          %v1450 = vmax.f32 %v1424, 0.0
          %v1451 = vmax.f32 %v1429, 0.0
          %v1452 = vmax.f32 %v1434, 0.0
          %v1453 = vadd.f32 %v1226, %v1437
          %v1454 = vadd.f32 %v1227, %v1438
          %v1455 = vadd.f32 %v1228, %v1439
          %v1456 = vadd.f32 %v1229, %v1440
          %v1457 = vadd.f32 %v1230, %v1441
          %v1458 = vadd.f32 %v1231, %v1442
          %v1459 = vadd.f32 %v1232, %v1443
          %v1460 = vadd.f32 %v1233, %v1444
          %v1461 = vadd.f32 %v1234, %v1445
          %v1462 = vadd.f32 %v1235, %v1446
          %v1463 = vadd.f32 %v1236, %v1447
          %v1464 = vadd.f32 %v1237, %v1448
          %v1465 = vadd.f32 %v1238, %v1449
          %v1466 = vadd.f32 %v1239, %v1450
          %v1467 = vadd.f32 %v1240, %v1451
          %v1468 = vadd.f32 %v1241, %v1452
          %1469 = vst [vmem:[%s1225] sm:$0xff] %v1453
          %1470 = vst [vmem:[%s1225 + $0x8] sm:$0xff] %v1454
          %1471 = vst [vmem:[%s1225 + $0x10] sm:$0xff] %v1455
          %1472 = vst [vmem:[%s1225 + $0x18] sm:$0xff] %v1456
          %1473 = vst [vmem:[%s1225 + $0x20] sm:$0xff] %v1457
          %1474 = vst [vmem:[%s1225 + $0x28] sm:$0xff] %v1458
          %1475 = vst [vmem:[%s1225 + $0x30] sm:$0xff] %v1459
          %1476 = vst [vmem:[%s1225 + $0x38] sm:$0xff] %v1460
          %1477 = vst [vmem:[%s1225 + $0x40] sm:$0xff] %v1461
          %1478 = vst [vmem:[%s1225 + $0x48] sm:$0xff] %v1462
          %1479 = vst [vmem:[%s1225 + $0x50] sm:$0xff] %v1463
          %1480 = vst [vmem:[%s1225 + $0x58] sm:$0xff] %v1464
          %1481 = vst [vmem:[%s1225 + $0x60] sm:$0xff] %v1465
          %1482 = vst [vmem:[%s1225 + $0x68] sm:$0xff] %v1466
          %1483 = vst [vmem:[%s1225 + $0x70] sm:$0xff] %v1467
          %1484 = vst [vmem:[%s1225 + $0x78] sm:$0xff] %v1468
        $region48: #{tpu_custom_call.1} parent=31 // pred_fallthru
          _
        %p1485 = scmp.eq.s32.totalorder %s991, 1
        %p1486 = pnand %p979, %p1485
        %p1487 = pneg %p1486
        // Predicated region
        $region49: #{tpu_custom_call.1} parent=31 // pred_check
          _
        $region50: #{tpu_custom_call.1} parent=31 // pred_check_branch
          %1489 = sbr.rel (%p1486) target = $region52
        $region51: #{tpu_custom_call.1} parent=31 // pred_region
          %v1490 = vld [vmem:[#allocation2] sm:$0xff]
          %v1491 = vld [vmem:[#allocation2 + $0x8] sm:$0xff]
          %v1492 = vld [vmem:[#allocation2 + $0x10] sm:$0xff]
          %v1493 = vld [vmem:[#allocation2 + $0x18] sm:$0xff]
          %v1494 = vld [vmem:[#allocation2 + $0x20] sm:$0xff]
          %v1495 = vld [vmem:[#allocation2 + $0x28] sm:$0xff]
          %v1496 = vld [vmem:[#allocation2 + $0x30] sm:$0xff]
          %v1497 = vld [vmem:[#allocation2 + $0x38] sm:$0xff]
          %v1498 = vld [vmem:[#allocation2 + $0x40] sm:$0xff]
          %v1499 = vld [vmem:[#allocation2 + $0x48] sm:$0xff]
          %v1500 = vld [vmem:[#allocation2 + $0x50] sm:$0xff]
          %v1501 = vld [vmem:[#allocation2 + $0x58] sm:$0xff]
          %v1502 = vld [vmem:[#allocation2 + $0x60] sm:$0xff]
          %v1503 = vld [vmem:[#allocation2 + $0x68] sm:$0xff]
          %v1504 = vld [vmem:[#allocation2 + $0x70] sm:$0xff]
          %v1505 = vld [vmem:[#allocation2 + $0x78] sm:$0xff]
          %v1506 = vld [vmem:[#allocation2 + $0x80] sm:$0xff]
          %v1507 = vld [vmem:[#allocation2 + $0x88] sm:$0xff]
          %v1508 = vld [vmem:[#allocation2 + $0x90] sm:$0xff]
          %v1509 = vld [vmem:[#allocation2 + $0x98] sm:$0xff]
          %v1510 = vld [vmem:[#allocation2 + $0xa0] sm:$0xff]
          %v1511 = vld [vmem:[#allocation2 + $0xa8] sm:$0xff]
          %v1512 = vld [vmem:[#allocation2 + $0xb0] sm:$0xff]
          %v1513 = vld [vmem:[#allocation2 + $0xb8] sm:$0xff]
          %v1514 = vld [vmem:[#allocation2 + $0xc0] sm:$0xff]
          %v1515 = vld [vmem:[#allocation2 + $0xc8] sm:$0xff]
          %v1516 = vld [vmem:[#allocation2 + $0xd0] sm:$0xff]
          %v1517 = vld [vmem:[#allocation2 + $0xd8] sm:$0xff]
          %v1518 = vld [vmem:[#allocation2 + $0xe0] sm:$0xff]
          %v1519 = vld [vmem:[#allocation2 + $0xe8] sm:$0xff]
          %v1520 = vld [vmem:[#allocation2 + $0xf0] sm:$0xff]
          %v1521 = vld [vmem:[#allocation2 + $0xf8] sm:$0xff]
          %v1522 = vld [vmem:[%s198] sm:$0xff]
          %v1523 = vld [vmem:[%s198 + $0x8] sm:$0xff]
          %v1524 = vld [vmem:[%s198 + $0x10] sm:$0xff]
          %v1525 = vld [vmem:[%s198 + $0x18] sm:$0xff]
          %v1526 = vld [vmem:[%s198 + $0x20] sm:$0xff]
          %v1527 = vld [vmem:[%s198 + $0x28] sm:$0xff]
          %v1528 = vld [vmem:[%s198 + $0x30] sm:$0xff]
          %v1529 = vld [vmem:[%s198 + $0x38] sm:$0xff]
          %v1530 = vld [vmem:[%s198 + $0x40] sm:$0xff]
          %v1531 = vld [vmem:[%s198 + $0x48] sm:$0xff]
          %v1532 = vld [vmem:[%s198 + $0x50] sm:$0xff]
          %v1533 = vld [vmem:[%s198 + $0x58] sm:$0xff]
          %v1534 = vld [vmem:[%s198 + $0x60] sm:$0xff]
          %v1535 = vld [vmem:[%s198 + $0x68] sm:$0xff]
          %v1536 = vld [vmem:[%s198 + $0x70] sm:$0xff]
          %v1537 = vld [vmem:[%s198 + $0x78] sm:$0xff]
          %v1538 = vld [vmem:[%s198 + $0x80] sm:$0xff]
          %v1539 = vld [vmem:[%s198 + $0x88] sm:$0xff]
          %v1540 = vld [vmem:[%s198 + $0x90] sm:$0xff]
          %v1541 = vld [vmem:[%s198 + $0x98] sm:$0xff]
          %v1542 = vld [vmem:[%s198 + $0xa0] sm:$0xff]
          %v1543 = vld [vmem:[%s198 + $0xa8] sm:$0xff]
          %v1544 = vld [vmem:[%s198 + $0xb0] sm:$0xff]
          %v1545 = vld [vmem:[%s198 + $0xb8] sm:$0xff]
          %v1546 = vld [vmem:[%s198 + $0xc0] sm:$0xff]
          %v1547 = vld [vmem:[%s198 + $0xc8] sm:$0xff]
          %v1548 = vld [vmem:[%s198 + $0xd0] sm:$0xff]
          %v1549 = vld [vmem:[%s198 + $0xd8] sm:$0xff]
          %v1550 = vld [vmem:[%s198 + $0xe0] sm:$0xff]
          %v1551 = vld [vmem:[%s198 + $0xe8] sm:$0xff]
          %v1552 = vld [vmem:[%s198 + $0xf0] sm:$0xff]
          %v1553 = vld [vmem:[%s198 + $0xf8] sm:$0xff]
          %1554 = vmatprep.subr.mxu0 0.0
          %1555 = vmatpush1.msra.mxu0 %v1490
          %1556 = vmatprep.subr.mxu0 0.0
          %1557 = vmatpush1.msra.mxu0 %v1491
          %1558 = vmatprep.subr.mxu0 0.0
          %1559 = vmatpush1.msra.mxu0 %v1492
          %1560 = vmatprep.subr.mxu0 0.0
          %1561 = vmatpush1.msra.mxu0 %v1493
          %1562 = vmatprep.subr.mxu0 0.0
          %1563 = vmatpush1.msra.mxu0 %v1494
          %1564 = vmatprep.subr.mxu0 0.0
          %1565 = vmatpush1.msra.mxu0 %v1495
          %1566 = vmatprep.subr.mxu0 0.0
          %1567 = vmatpush1.msra.mxu0 %v1496
          %1568 = vmatprep.subr.mxu0 0.0
          %1569 = vmatpush1.msra.mxu0 %v1497
          %1570 = vmatprep.subr.mxu0 0.0
          %1571 = vmatpush1.msra.mxu0 %v1498
          %1572 = vmatprep.subr.mxu0 0.0
          %1573 = vmatpush1.msra.mxu0 %v1499
          %1574 = vmatprep.subr.mxu0 0.0
          %1575 = vmatpush1.msra.mxu0 %v1500
          %1576 = vmatprep.subr.mxu0 0.0
          %1577 = vmatpush1.msra.mxu0 %v1501
          %1578 = vmatprep.subr.mxu0 0.0
          %1579 = vmatpush1.msra.mxu0 %v1502
          %1580 = vmatprep.subr.mxu0 0.0
          %1581 = vmatpush1.msra.mxu0 %v1503
          %1582 = vmatprep.subr.mxu0 0.0
          %1583 = vmatpush1.msra.mxu0 %v1504
          %1584 = vmatprep.subr.mxu0 0.0
          %1585 = vmatpush1.msra.mxu0 %v1505
          %1586 = vmatprep.subr.mxu0 0.0
          %1587 = vmatpush1.msra.mxu0 %v1506
          %1588 = vmatprep.subr.mxu0 0.0
          %1589 = vmatpush1.msra.mxu0 %v1507
          %1590 = vmatprep.subr.mxu0 0.0
          %1591 = vmatpush1.msra.mxu0 %v1508
          %1592 = vmatprep.subr.mxu0 0.0
          %1593 = vmatpush1.msra.mxu0 %v1509
          %1594 = vmatprep.subr.mxu0 0.0
          %1595 = vmatpush1.msra.mxu0 %v1510
          %1596 = vmatprep.subr.mxu0 0.0
          %1597 = vmatpush1.msra.mxu0 %v1511
          %1598 = vmatprep.subr.mxu0 0.0
          %1599 = vmatpush1.msra.mxu0 %v1512
          %1600 = vmatprep.subr.mxu0 0.0
          %1601 = vmatpush1.msra.mxu0 %v1513
          %1602 = vmatprep.subr.mxu0 0.0
          %1603 = vmatpush1.msra.mxu0 %v1514
          %1604 = vmatprep.subr.mxu0 0.0
          %1605 = vmatpush1.msra.mxu0 %v1515
          %1606 = vmatprep.subr.mxu0 0.0
          %1607 = vmatpush1.msra.mxu0 %v1516
          %1608 = vmatprep.subr.mxu0 0.0
          %1609 = vmatpush1.msra.mxu0 %v1517
          %1610 = vmatprep.subr.mxu0 0.0
          %1611 = vmatpush1.msra.mxu0 %v1518
          %1612 = vmatprep.subr.mxu0 0.0
          %1613 = vmatpush1.msra.mxu0 %v1519
          %1614 = vmatprep.subr.mxu0 0.0
          %1615 = vmatpush1.msra.mxu0 %v1520
          %1616 = vmatprep.subr.mxu0 0.0
          %1617 = vmatpush1.msra.mxu0 %v1521
          %1618 = vmatprep.mubr.f32.mxu0 %v1523
          %1619 = vmatmul.mubr.f32.gmra.mrb[0].mxu0 %v1522
          %v1620 = vpop.f32.mrb[0].mxu0
          %v1621 = vadd.f32 0.0, %v1620
          %v1622 = vpop.f32.mrb[0].mxu0
          %1623 = vmatprep.mubr.f32.mxu0 %v1525
          %1624 = vmatmul.mubr.f32.gmra.mrb[0].mxu0 %v1524
          %v1625 = vpop.f32.mrb[0].mxu0
          %v1626 = vadd.f32 0.0, %v1625
          %v1627 = vpop.f32.mrb[0].mxu0
          %1628 = vmatprep.mubr.f32.mxu0 %v1527
          %1629 = vmatmul.mubr.f32.gmra.mrb[0].mxu0 %v1526
          %v1630 = vpop.f32.mrb[0].mxu0
          %v1631 = vadd.f32 0.0, %v1630
          %v1632 = vpop.f32.mrb[0].mxu0
          %1633 = vmatprep.mubr.f32.mxu0 %v1529
          %1634 = vmatmul.mubr.f32.gmra.mrb[0].mxu0 %v1528
          %v1635 = vpop.f32.mrb[0].mxu0
          %v1636 = vadd.f32 0.0, %v1635
          %v1637 = vpop.f32.mrb[0].mxu0
          %1638 = vmatprep.mubr.f32.mxu0 %v1531
          %1639 = vmatmul.mubr.f32.gmra.mrb[0].mxu0 %v1530
          %v1640 = vpop.f32.mrb[0].mxu0
          %v1641 = vadd.f32 0.0, %v1640
          %v1642 = vpop.f32.mrb[0].mxu0
          %1643 = vmatprep.mubr.f32.mxu0 %v1533
          %1644 = vmatmul.mubr.f32.gmra.mrb[0].mxu0 %v1532
          %v1645 = vpop.f32.mrb[0].mxu0
          %v1646 = vadd.f32 0.0, %v1645
          %v1647 = vpop.f32.mrb[0].mxu0
          %1648 = vmatprep.mubr.f32.mxu0 %v1535
          %1649 = vmatmul.mubr.f32.gmra.mrb[0].mxu0 %v1534
          %v1650 = vpop.f32.mrb[0].mxu0
          %v1651 = vadd.f32 0.0, %v1650
          %v1652 = vpop.f32.mrb[0].mxu0
          %1653 = vmatprep.mubr.f32.mxu0 %v1537
          %1654 = vmatmul.mubr.f32.gmra.mrb[0].mxu0 %v1536
          %v1655 = vpop.f32.mrb[0].mxu0
          %v1656 = vadd.f32 0.0, %v1655
          %v1657 = vpop.f32.mrb[0].mxu0
          %1658 = vmatprep.mubr.f32.mxu0 %v1539
          %1659 = vmatmul.mubr.f32.gmra.mrb[0].mxu0 %v1538
          %v1660 = vpop.f32.mrb[0].mxu0
          %v1661 = vadd.f32 0.0, %v1660
          %v1662 = vpop.f32.mrb[0].mxu0
          %1663 = vmatprep.mubr.f32.mxu0 %v1541
          %1664 = vmatmul.mubr.f32.gmra.mrb[0].mxu0 %v1540
          %v1665 = vpop.f32.mrb[0].mxu0
          %v1666 = vadd.f32 0.0, %v1665
          %v1667 = vpop.f32.mrb[0].mxu0
          %1668 = vmatprep.mubr.f32.mxu0 %v1543
          %1669 = vmatmul.mubr.f32.gmra.mrb[0].mxu0 %v1542
          %v1670 = vpop.f32.mrb[0].mxu0
          %v1671 = vadd.f32 0.0, %v1670
          %v1672 = vpop.f32.mrb[0].mxu0
          %1673 = vmatprep.mubr.f32.mxu0 %v1545
          %1674 = vmatmul.mubr.f32.gmra.mrb[0].mxu0 %v1544
          %v1675 = vpop.f32.mrb[0].mxu0
          %v1676 = vadd.f32 0.0, %v1675
          %v1677 = vpop.f32.mrb[0].mxu0
          %1678 = vmatprep.mubr.f32.mxu0 %v1547
          %1679 = vmatmul.mubr.f32.gmra.mrb[0].mxu0 %v1546
          %v1680 = vpop.f32.mrb[0].mxu0
          %v1681 = vadd.f32 0.0, %v1680
          %v1682 = vpop.f32.mrb[0].mxu0
          %1683 = vmatprep.mubr.f32.mxu0 %v1549
          %1684 = vmatmul.mubr.f32.gmra.mrb[0].mxu0 %v1548
          %v1685 = vpop.f32.mrb[0].mxu0
          %v1686 = vadd.f32 0.0, %v1685
          %v1687 = vpop.f32.mrb[0].mxu0
          %1688 = vmatprep.mubr.f32.mxu0 %v1551
          %1689 = vmatmul.mubr.f32.gmra.mrb[0].mxu0 %v1550
          %v1690 = vpop.f32.mrb[0].mxu0
          %v1691 = vadd.f32 0.0, %v1690
          %v1692 = vpop.f32.mrb[0].mxu0
          %1693 = vmatprep.mubr.f32.mxu0 %v1553
          %1694 = vmatmul.mubr.f32.gmra.mrb[0].mxu0 %v1552
          %v1695 = vpop.f32.mrb[0].mxu0
          %v1696 = vadd.f32 0.0, %v1695
          %v1697 = vpop.f32.mrb[0].mxu0
          %1698 = vdwg.mxu0
          %s1699 = sadd.s32 %s236, 256
          %s1700 = scalar_lea.vmem [#allocation2], %s1699
          %vm1701 = vcmask 130048
          %1702 = vst.msk [vmem:[%s1700] sm:$0xff] %vm1701, %v1621
          %1703 = vst.msk [vmem:[%s1700 + $0x8] sm:$0xff] %vm1701, %v1626
          %1704 = vst.msk [vmem:[%s1700 + $0x10] sm:$0xff] %vm1701, %v1631
          %1705 = vst.msk [vmem:[%s1700 + $0x18] sm:$0xff] %vm1701, %v1636
          %1706 = vst.msk [vmem:[%s1700 + $0x20] sm:$0xff] %vm1701, %v1641
          %1707 = vst.msk [vmem:[%s1700 + $0x28] sm:$0xff] %vm1701, %v1646
          %1708 = vst.msk [vmem:[%s1700 + $0x30] sm:$0xff] %vm1701, %v1651
          %1709 = vst.msk [vmem:[%s1700 + $0x38] sm:$0xff] %vm1701, %v1656
          %1710 = vst.msk [vmem:[%s1700 + $0x40] sm:$0xff] %vm1701, %v1661
          %1711 = vst.msk [vmem:[%s1700 + $0x48] sm:$0xff] %vm1701, %v1666
          %1712 = vst.msk [vmem:[%s1700 + $0x50] sm:$0xff] %vm1701, %v1671
          %1713 = vst.msk [vmem:[%s1700 + $0x58] sm:$0xff] %vm1701, %v1676
          %1714 = vst.msk [vmem:[%s1700 + $0x60] sm:$0xff] %vm1701, %v1681
          %1715 = vst.msk [vmem:[%s1700 + $0x68] sm:$0xff] %vm1701, %v1686
          %1716 = vst.msk [vmem:[%s1700 + $0x70] sm:$0xff] %vm1701, %v1691
          %1717 = vst.msk [vmem:[%s1700 + $0x78] sm:$0xff] %vm1701, %v1696
          %s1718 = scalar_lea.vmem [#allocation3], %s236
          %v1719 = vld [vmem:[%s1718] sm:$0xff]
          %v1720 = vld [vmem:[%s1718 + $0x8] sm:$0xff]
          %v1721 = vld [vmem:[%s1718 + $0x10] sm:$0xff]
          %v1722 = vld [vmem:[%s1718 + $0x18] sm:$0xff]
          %v1723 = vld [vmem:[%s1718 + $0x20] sm:$0xff]
          %v1724 = vld [vmem:[%s1718 + $0x28] sm:$0xff]
          %v1725 = vld [vmem:[%s1718 + $0x30] sm:$0xff]
          %v1726 = vld [vmem:[%s1718 + $0x38] sm:$0xff]
          %v1727 = vld [vmem:[%s1718 + $0x40] sm:$0xff]
          %v1728 = vld [vmem:[%s1718 + $0x48] sm:$0xff]
          %v1729 = vld [vmem:[%s1718 + $0x50] sm:$0xff]
          %v1730 = vld [vmem:[%s1718 + $0x58] sm:$0xff]
          %v1731 = vld [vmem:[%s1718 + $0x60] sm:$0xff]
          %v1732 = vld [vmem:[%s1718 + $0x68] sm:$0xff]
          %v1733 = vld [vmem:[%s1718 + $0x70] sm:$0xff]
          %v1734 = vld [vmem:[%s1718 + $0x78] sm:$0xff]
          %v1735 = vld [vmem:[%s234] sm:$0xff]
          %v1736 = vld [vmem:[%s234 + $0x8] sm:$0xff]
          %v1738 = vsel %vm1701, %v1621, 0
          %v1741 = vsel %vm1701, %v1626, 0
          %v1744 = vsel %vm1701, %v1631, 0
          %v1747 = vsel %vm1701, %v1636, 0
          %v1750 = vsel %vm1701, %v1641, 0
          %v1753 = vsel %vm1701, %v1646, 0
          %v1756 = vsel %vm1701, %v1651, 0
          %v1759 = vsel %vm1701, %v1656, 0
          %v1762 = vsel %vm1701, %v1661, 0
          %v1765 = vsel %vm1701, %v1666, 0
          %v1768 = vsel %vm1701, %v1671, 0
          %v1771 = vsel %vm1701, %v1676, 0
          %v1774 = vsel %vm1701, %v1681, 0
          %v1777 = vsel %vm1701, %v1686, 0
          %v1780 = vsel %vm1701, %v1691, 0
          %v1783 = vsel %vm1701, %v1696, 0
          %1785 = vmatprep.subr.mxu0 0.0
          %1786 = vmatpush1.msra.mxu0 %v1735
          %1787 = vmatprep.subr.mxu0 0.0
          %1788 = vmatpush1.msra.mxu0 %v1736
          %1789 = vmatprep.subr.mxu0 0.0
          %1790 = vmatpush1.msra.mxu0 0.0
          %1791 = vmatprep.subr.mxu0 0.0
          %1792 = vmatpush1.msra.mxu0 0.0
          %1793 = vmatprep.subr.mxu0 0.0
          %1794 = vmatpush1.msra.mxu0 0.0
          %1795 = vmatprep.subr.mxu0 0.0
          %1796 = vmatpush1.msra.mxu0 0.0
          %1797 = vmatprep.subr.mxu0 0.0
          %1798 = vmatpush1.msra.mxu0 0.0
          %1799 = vmatprep.subr.mxu0 0.0
          %1800 = vmatpush1.msra.mxu0 0.0
          %1801 = vmatprep.subr.mxu0 0.0
          %1802 = vmatpush1.msra.mxu0 0.0
          %1803 = vmatprep.subr.mxu0 0.0
          %1804 = vmatpush1.msra.mxu0 0.0
          %1805 = vmatprep.subr.mxu0 0.0
          %1806 = vmatpush1.msra.mxu0 0.0
          %1807 = vmatprep.subr.mxu0 0.0
          %1808 = vmatpush1.msra.mxu0 0.0
          %1809 = vmatprep.subr.mxu0 0.0
          %1810 = vmatpush1.msra.mxu0 0.0
          %1811 = vmatprep.subr.mxu0 0.0
          %1812 = vmatpush1.msra.mxu0 0.0
          %1813 = vmatprep.subr.mxu0 0.0
          %1814 = vmatpush1.msra.mxu0 0.0
          %1815 = vmatprep.subr.mxu0 0.0
          %1816 = vmatpush1.msra.mxu0 0.0
          %1817 = vmatprep.subr.mxu0 0.0
          %1818 = vmatpush1.msra.mxu0 0.0
          %1819 = vmatprep.subr.mxu0 0.0
          %1820 = vmatpush1.msra.mxu0 0.0
          %1821 = vmatprep.subr.mxu0 0.0
          %1822 = vmatpush1.msra.mxu0 0.0
          %1823 = vmatprep.subr.mxu0 0.0
          %1824 = vmatpush1.msra.mxu0 0.0
          %1825 = vmatprep.subr.mxu0 0.0
          %1826 = vmatpush1.msra.mxu0 0.0
          %1827 = vmatprep.subr.mxu0 0.0
          %1828 = vmatpush1.msra.mxu0 0.0
          %1829 = vmatprep.subr.mxu0 0.0
          %1830 = vmatpush1.msra.mxu0 0.0
          %1831 = vmatprep.subr.mxu0 0.0
          %1832 = vmatpush1.msra.mxu0 0.0
          %1833 = vmatprep.subr.mxu0 0.0
          %1834 = vmatpush1.msra.mxu0 0.0
          %1835 = vmatprep.subr.mxu0 0.0
          %1836 = vmatpush1.msra.mxu0 0.0
          %1837 = vmatprep.subr.mxu0 0.0
          %1838 = vmatpush1.msra.mxu0 0.0
          %1839 = vmatprep.subr.mxu0 0.0
          %1840 = vmatpush1.msra.mxu0 0.0
          %1841 = vmatprep.subr.mxu0 0.0
          %1842 = vmatpush1.msra.mxu0 0.0
          %1843 = vmatprep.subr.mxu0 0.0
          %1844 = vmatpush1.msra.mxu0 0.0
          %1845 = vmatprep.subr.mxu0 0.0
          %1846 = vmatpush1.msra.mxu0 0.0
          %1847 = vmatprep.subr.mxu0 0.0
          %1848 = vmatpush1.msra.mxu0 0.0
          %1849 = vmatprep.mubr.f32.mxu0 0.0
          %1850 = vmatmul.mubr.f32.gmra.mrb[0].mxu0 %v1738
          %v1851 = vpop.f32.mrb[0].mxu0
          %v1852 = vadd.f32 0.0, %v1851
          %v1853 = vpop.f32.mrb[0].mxu0
          %1854 = vmatprep.mubr.f32.mxu0 0.0
          %1855 = vmatmul.mubr.f32.gmra.mrb[0].mxu0 %v1741
          %v1856 = vpop.f32.mrb[0].mxu0
          %v1857 = vadd.f32 0.0, %v1856
          %v1858 = vpop.f32.mrb[0].mxu0
          %1859 = vmatprep.mubr.f32.mxu0 0.0
          %1860 = vmatmul.mubr.f32.gmra.mrb[0].mxu0 %v1744
          %v1861 = vpop.f32.mrb[0].mxu0
          %v1862 = vadd.f32 0.0, %v1861
          %v1863 = vpop.f32.mrb[0].mxu0
          %1864 = vmatprep.mubr.f32.mxu0 0.0
          %1865 = vmatmul.mubr.f32.gmra.mrb[0].mxu0 %v1747
          %v1866 = vpop.f32.mrb[0].mxu0
          %v1867 = vadd.f32 0.0, %v1866
          %v1868 = vpop.f32.mrb[0].mxu0
          %1869 = vmatprep.mubr.f32.mxu0 0.0
          %1870 = vmatmul.mubr.f32.gmra.mrb[0].mxu0 %v1750
          %v1871 = vpop.f32.mrb[0].mxu0
          %v1872 = vadd.f32 0.0, %v1871
          %v1873 = vpop.f32.mrb[0].mxu0
          %1874 = vmatprep.mubr.f32.mxu0 0.0
          %1875 = vmatmul.mubr.f32.gmra.mrb[0].mxu0 %v1753
          %v1876 = vpop.f32.mrb[0].mxu0
          %v1877 = vadd.f32 0.0, %v1876
          %v1878 = vpop.f32.mrb[0].mxu0
          %1879 = vmatprep.mubr.f32.mxu0 0.0
          %1880 = vmatmul.mubr.f32.gmra.mrb[0].mxu0 %v1756
          %v1881 = vpop.f32.mrb[0].mxu0
          %v1882 = vadd.f32 0.0, %v1881
          %v1883 = vpop.f32.mrb[0].mxu0
          %1884 = vmatprep.mubr.f32.mxu0 0.0
          %1885 = vmatmul.mubr.f32.gmra.mrb[0].mxu0 %v1759
          %v1886 = vpop.f32.mrb[0].mxu0
          %v1887 = vadd.f32 0.0, %v1886
          %v1888 = vpop.f32.mrb[0].mxu0
          %1889 = vmatprep.mubr.f32.mxu0 0.0
          %1890 = vmatmul.mubr.f32.gmra.mrb[0].mxu0 %v1762
          %v1891 = vpop.f32.mrb[0].mxu0
          %v1892 = vadd.f32 0.0, %v1891
          %v1893 = vpop.f32.mrb[0].mxu0
          %1894 = vmatprep.mubr.f32.mxu0 0.0
          %1895 = vmatmul.mubr.f32.gmra.mrb[0].mxu0 %v1765
          %v1896 = vpop.f32.mrb[0].mxu0
          %v1897 = vadd.f32 0.0, %v1896
          %v1898 = vpop.f32.mrb[0].mxu0
          %1899 = vmatprep.mubr.f32.mxu0 0.0
          %1900 = vmatmul.mubr.f32.gmra.mrb[0].mxu0 %v1768
          %v1901 = vpop.f32.mrb[0].mxu0
          %v1902 = vadd.f32 0.0, %v1901
          %v1903 = vpop.f32.mrb[0].mxu0
          %1904 = vmatprep.mubr.f32.mxu0 0.0
          %1905 = vmatmul.mubr.f32.gmra.mrb[0].mxu0 %v1771
          %v1906 = vpop.f32.mrb[0].mxu0
          %v1907 = vadd.f32 0.0, %v1906
          %v1908 = vpop.f32.mrb[0].mxu0
          %1909 = vmatprep.mubr.f32.mxu0 0.0
          %1910 = vmatmul.mubr.f32.gmra.mrb[0].mxu0 %v1774
          %v1911 = vpop.f32.mrb[0].mxu0
          %v1912 = vadd.f32 0.0, %v1911
          %v1913 = vpop.f32.mrb[0].mxu0
          %1914 = vmatprep.mubr.f32.mxu0 0.0
          %1915 = vmatmul.mubr.f32.gmra.mrb[0].mxu0 %v1777
          %v1916 = vpop.f32.mrb[0].mxu0
          %v1917 = vadd.f32 0.0, %v1916
          %v1918 = vpop.f32.mrb[0].mxu0
          %1919 = vmatprep.mubr.f32.mxu0 0.0
          %1920 = vmatmul.mubr.f32.gmra.mrb[0].mxu0 %v1780
          %v1921 = vpop.f32.mrb[0].mxu0
          %v1922 = vadd.f32 0.0, %v1921
          %v1923 = vpop.f32.mrb[0].mxu0
          %1924 = vmatprep.mubr.f32.mxu0 0.0
          %1925 = vmatmul.mubr.f32.gmra.mrb[0].mxu0 %v1783
          %v1926 = vpop.f32.mrb[0].mxu0
          %v1927 = vadd.f32 0.0, %v1926
          %v1928 = vpop.f32.mrb[0].mxu0
          %1929 = vdwg.mxu0
          %v1930 = vmax.f32 %v1852, 0.0
          %v1931 = vmax.f32 %v1857, 0.0
          %v1932 = vmax.f32 %v1862, 0.0
          %v1933 = vmax.f32 %v1867, 0.0
          %v1934 = vmax.f32 %v1872, 0.0
          %v1935 = vmax.f32 %v1877, 0.0
          %v1936 = vmax.f32 %v1882, 0.0
          %v1937 = vmax.f32 %v1887, 0.0
          %v1938 = vmax.f32 %v1892, 0.0
          %v1939 = vmax.f32 %v1897, 0.0
          %v1940 = vmax.f32 %v1902, 0.0
          %v1941 = vmax.f32 %v1907, 0.0
          %v1942 = vmax.f32 %v1912, 0.0
          %v1943 = vmax.f32 %v1917, 0.0
          %v1944 = vmax.f32 %v1922, 0.0
          %v1945 = vmax.f32 %v1927, 0.0
          %v1946 = vadd.f32 %v1719, %v1930
          %v1947 = vadd.f32 %v1720, %v1931
          %v1948 = vadd.f32 %v1721, %v1932
          %v1949 = vadd.f32 %v1722, %v1933
          %v1950 = vadd.f32 %v1723, %v1934
          %v1951 = vadd.f32 %v1724, %v1935
          %v1952 = vadd.f32 %v1725, %v1936
          %v1953 = vadd.f32 %v1726, %v1937
          %v1954 = vadd.f32 %v1727, %v1938
          %v1955 = vadd.f32 %v1728, %v1939
          %v1956 = vadd.f32 %v1729, %v1940
          %v1957 = vadd.f32 %v1730, %v1941
          %v1958 = vadd.f32 %v1731, %v1942
          %v1959 = vadd.f32 %v1732, %v1943
          %v1960 = vadd.f32 %v1733, %v1944
          %v1961 = vadd.f32 %v1734, %v1945
          %1962 = vst [vmem:[%s1718] sm:$0xff] %v1946
          %1963 = vst [vmem:[%s1718 + $0x8] sm:$0xff] %v1947
          %1964 = vst [vmem:[%s1718 + $0x10] sm:$0xff] %v1948
          %1965 = vst [vmem:[%s1718 + $0x18] sm:$0xff] %v1949
          %1966 = vst [vmem:[%s1718 + $0x20] sm:$0xff] %v1950
          %1967 = vst [vmem:[%s1718 + $0x28] sm:$0xff] %v1951
          %1968 = vst [vmem:[%s1718 + $0x30] sm:$0xff] %v1952
          %1969 = vst [vmem:[%s1718 + $0x38] sm:$0xff] %v1953
          %1970 = vst [vmem:[%s1718 + $0x40] sm:$0xff] %v1954
          %1971 = vst [vmem:[%s1718 + $0x48] sm:$0xff] %v1955
          %1972 = vst [vmem:[%s1718 + $0x50] sm:$0xff] %v1956
          %1973 = vst [vmem:[%s1718 + $0x58] sm:$0xff] %v1957
          %1974 = vst [vmem:[%s1718 + $0x60] sm:$0xff] %v1958
          %1975 = vst [vmem:[%s1718 + $0x68] sm:$0xff] %v1959
          %1976 = vst [vmem:[%s1718 + $0x70] sm:$0xff] %v1960
          %1977 = vst [vmem:[%s1718 + $0x78] sm:$0xff] %v1961
        $region52: #{tpu_custom_call.1} parent=31 // pred_fallthru
          _
        %s1978 = scalar_lea.vmem [#allocation3], %s236
        %v1979 = vld [vmem:[%s1978] sm:$0xff]
        %v1980 = vld [vmem:[%s1978 + $0x8] sm:$0xff]
        %v1981 = vld [vmem:[%s1978 + $0x10] sm:$0xff]
        %v1982 = vld [vmem:[%s1978 + $0x18] sm:$0xff]
        %v1983 = vld [vmem:[%s1978 + $0x20] sm:$0xff]
        %v1984 = vld [vmem:[%s1978 + $0x28] sm:$0xff]
        %v1985 = vld [vmem:[%s1978 + $0x30] sm:$0xff]
        %v1986 = vld [vmem:[%s1978 + $0x38] sm:$0xff]
        %v1987 = vld [vmem:[%s1978 + $0x40] sm:$0xff]
        %v1988 = vld [vmem:[%s1978 + $0x48] sm:$0xff]
        %v1989 = vld [vmem:[%s1978 + $0x50] sm:$0xff]
        %v1990 = vld [vmem:[%s1978 + $0x58] sm:$0xff]
        %v1991 = vld [vmem:[%s1978 + $0x60] sm:$0xff]
        %v1992 = vld [vmem:[%s1978 + $0x68] sm:$0xff]
        %v1993 = vld [vmem:[%s1978 + $0x70] sm:$0xff]
        %v1994 = vld [vmem:[%s1978 + $0x78] sm:$0xff]
        %1995 = vst [vmem:[%s225] sm:$0xff] %v1979
        %1996 = vst [vmem:[%s225 + $0x8] sm:$0xff] %v1980
        %1997 = vst [vmem:[%s225 + $0x10] sm:$0xff] %v1981
        %1998 = vst [vmem:[%s225 + $0x18] sm:$0xff] %v1982
        %1999 = vst [vmem:[%s225 + $0x20] sm:$0xff] %v1983
        %2000 = vst [vmem:[%s225 + $0x28] sm:$0xff] %v1984
        %2001 = vst [vmem:[%s225 + $0x30] sm:$0xff] %v1985
        %2002 = vst [vmem:[%s225 + $0x38] sm:$0xff] %v1986
        %2003 = vst [vmem:[%s225 + $0x40] sm:$0xff] %v1987
        %2004 = vst [vmem:[%s225 + $0x48] sm:$0xff] %v1988
        %2005 = vst [vmem:[%s225 + $0x50] sm:$0xff] %v1989
        %2006 = vst [vmem:[%s225 + $0x58] sm:$0xff] %v1990
        %2007 = vst [vmem:[%s225 + $0x60] sm:$0xff] %v1991
        %2008 = vst [vmem:[%s225 + $0x68] sm:$0xff] %v1992
        %2009 = vst [vmem:[%s225 + $0x70] sm:$0xff] %v1993
        %2010 = vst [vmem:[%s225 + $0x78] sm:$0xff] %v1994
        %s2011 = sand.u32 %s119, 1
        %s2012 = scalar_lea.sflag [#allocation6], %s2011
        %s2013 = sand.u32 %s119, 1
        %s2014 = smul.addr %s2013, 128
        %s2015 = scalar_lea.vmem [#allocation7], %s2014
        // Predicated region
        $region53: #{tpu_custom_call.1} parent=31 // pred_check
          %p2016 = pneg %p129
        $region54: #{tpu_custom_call.1} parent=31 // pred_check_branch
          %2018 = sbr.rel (%p2016) target = $region56
        $region55: #{tpu_custom_call.1} parent=31 // pred_region
          %s2019 = smul.u32 16, %s25
          %s2021 = ssub.s32 2048, 2048
          %2022 = vsyncadd %s2012, %s2021
          %s2023 = smul.addr %s2019, 128
          %s2024 = scalar_lea.hbm %s3, %s2023
          %s2025 = sshll.u32 %s2015, 4
          %s2026 = int_to_ptr.vmem [resolvable:$true] %s2025
          %2031 = dma.vmem_to_hbm [thread:$0]  %s2026, 2048, %s2024, %s2012, 128, 128, 8
        $region56: #{tpu_custom_call.1} parent=31 // pred_fallthru
          _
      $region32: #{tpu_custom_call.1} parent=5 // pred_fallthru
        _
      %p2032 = scmp.le.s32.totalorder 2, %s15
      // Predicated region
      $region57: #{tpu_custom_call.1} parent=5 // pred_check
        %p2033 = pneg %p2032
      $region58: #{tpu_custom_call.1} parent=5 // pred_check_branch
        %2035 = sbr.rel (%p2033) target = $region60
      $region59: #{tpu_custom_call.1} parent=5 // pred_region
        %s2036 = ssub.s32 %s15, 2
        // Predicated region
        $region61: #{tpu_custom_call.1} parent=59 // pred_check
          %p2037 = pneg %p135
        $region62: #{tpu_custom_call.1} parent=59 // pred_check_branch
          %2039 = sbr.rel (%p2037) target = $region64
        $region63: #{tpu_custom_call.1} parent=59 // pred_region
          %s2040 = sand.u32 %s120, 1
          %s2041 = scalar_lea.sflag [#allocation6], %s2040
          %s2042 = sand.u32 %s120, 1
          %s2043 = smul.addr %s2042, 128
          %s2044 = scalar_lea.vmem [#allocation7], %s2043
          %2045 = dma.done %s2041, 2048
        $region64: #{tpu_custom_call.1} parent=59 // pred_fallthru
          _
      $region60: #{tpu_custom_call.1} parent=5 // pred_fallthru
        _
    $region6: #{tpu_custom_call.1} parent=1 // loop_footer
      %s19 = sadd.s32 1, %s15
    $region7: #{tpu_custom_call.1} parent=1 // loop_footer_branch
      %14 = sbr.rel target = $region3
    $region8: #{tpu_custom_call.1} parent=1 // loop_exit
      _
    %2046 = vsyncpa [#allocation5], 1
    %s2047 = scalar_lea.sflag [#allocation5], 1
    %2048 = vsyncpa %s2047, 1
    %2049 = vsyncpa [#allocation6], 1
    %s2050 = scalar_lea.sflag [#allocation6], 1
    %2051 = vsyncpa %s2050, 1

</llo_original>
